<compile_context>
chip_gen: v7x
topology: tpu7x:2x2x1
jax: 0.10.0
libtpu: 0.0.40
codegen_flags: <defaults>
</compile_context>

<pallas_src>
import functools

import numpy as np

import jax
import jax.numpy as jnp
from jax.experimental import pallas as pl
from jax.experimental.pallas import tpu as pltpu


# ---------------------------------------------------------------------------
# Fused Pallas kernel: deconv1+ReLU -> deconv2+ReLU -> 1x1 conv+ReLU -> avgpool
# ---------------------------------------------------------------------------
def _fused_head_kernel(x_ref, w1_ref, b1_ref, w2_ref, b2_ref, w3_ref, b3_ref,
                       pool_ref, o_ref, p1_ref, p2_ref):
    # Shapes (per batch element, channel-interleaved 2D layout [H, W*C]):
    #   x_ref   : [1, 8, 8*Cin]
    #   w1_ref  : [3, 12*Cin, 10*16]   Toeplitz matrices, one per kernel row
    #   b1_ref  : [1, 10*16]
    #   w2_ref  : [3, 14*16, 12*10]
    #   b2_ref  : [1, 12*10]
    #   w3_ref  : [12*10, 12*10]       block-diagonal 1x1-conv weight
    #   b3_ref  : [1, 12*10]
    #   pool_ref: [12*10, 10]          tiled identity / 144 (avg-pool on MXU)
    #   o_ref   : [1, 1, 10]
    #   p1_ref  : VMEM [12, 12*Cin]    zero-padded input canvas
    #   p2_ref  : VMEM [14, 14*16]     zero-padded deconv1-output canvas
    cin = x_ref.shape[2] // 8
    co1 = 16

    # --- zero the padded canvases (borders stay zero; centers overwritten) ---
    p1_ref[...] = jnp.zeros_like(p1_ref)
    p2_ref[...] = jnp.zeros_like(p2_ref)

    # --- place the 8x8 input into the (2,2)-padded 12x12 canvas ------------
    p1_ref[2:10, 2 * cin:10 * cin] = x_ref[0]

    # --- deconv_1 (ConvTranspose2d Cin->16, 3x3) + ReLU ----------------------
    # valid conv on the padded canvas == 3 row-shifted matmuls on the MXU.
    h1 = jnp.dot(p1_ref[0:10, :], w1_ref[0], preferred_element_type=jnp.float32)
    h1 = h1 + jnp.dot(p1_ref[1:11, :], w1_ref[1], preferred_element_type=jnp.float32)
    h1 = h1 + jnp.dot(p1_ref[2:12, :], w1_ref[2], preferred_element_type=jnp.float32)
    h1 = jnp.maximum(h1 + b1_ref[...], 0.0)                 # [10, 10*16]

    # --- place deconv_1 output into the (2,2)-padded 14x14 canvas ----------
    p2_ref[2:12, 2 * co1:12 * co1] = h1

    # --- deconv_2 (ConvTranspose2d 16->10, 3x3) + ReLU -----------------------
    h2 = jnp.dot(p2_ref[0:12, :], w2_ref[0], preferred_element_type=jnp.float32)
    h2 = h2 + jnp.dot(p2_ref[1:13, :], w2_ref[1], preferred_element_type=jnp.float32)
    h2 = h2 + jnp.dot(p2_ref[2:14, :], w2_ref[2], preferred_element_type=jnp.float32)
    h2 = jnp.maximum(h2 + b2_ref[...], 0.0)                 # [12, 12*10]

    # --- deconv_3 (Conv2d 10->10, 1x1, block-diagonal weight) + ReLU --------
    h3 = jnp.dot(h2, w3_ref[...], preferred_element_type=jnp.float32)
    h3 = jnp.maximum(h3 + b3_ref[...], 0.0)                 # [12, 12*10]

    # --- AvgPool2d(12): per-channel mean over the 12x12 map -----------------
    # The 144-pixel reduction rides the MXU (pool matrix carries 1/144); only
    # a 12-row sublane sum remains.
    col = jnp.dot(h3, pool_ref[...], preferred_element_type=jnp.float32)  # [12, 10]
    o_ref[0] = jnp.sum(col, axis=0, keepdims=True)           # [1, 10]


# ---------------------------------------------------------------------------
# One-time weight preparation (hoisted out of the forward pass)
# ---------------------------------------------------------------------------
def _deconv_to_toeplitz(w_t, wp, wo):
    """torch ConvTranspose2d weight [Cin, Cout, 3, 3] -> [3, wp*Cin, wo*Cout]
    matrices T_kh so that, for each kernel row kh,
        out2d[i, j*Cout+co] += (padded2d[i+kh, :] @ T_kh)[j*Cout+co]
    with the channel-interleaved 2D layout out2d[i, j*Cout+co] = out[i, j, co].
    Encodes the stride-1 transposed conv as a valid conv over the (2,2)-padded
    input with a spatially flipped kernel."""
    w_t = np.asarray(w_t, dtype=np.float32)
    cin, cout, kh_sz, kw_sz = w_t.shape
    # flipped kernel for the equivalent valid conv: wf[kh, kw, ci, co]
    wf = np.transpose(w_t[:, :, ::-1, ::-1], (2, 3, 0, 1))
    mats = np.zeros((kh_sz, wp * cin, wo * cout), np.float32)
    for kh in range(kh_sz):
        for j in range(wo):
            for kw in range(kw_sz):
                w_in = j + kw
                mats[kh,
                     w_in * cin:(w_in + 1) * cin,
                     j * cout:(j + 1) * cout] = wf[kh, kw]
    return jnp.asarray(mats)


def prepare_params(params):
    """Transform torch-layout params into the fused-kernel matmul layout."""
    b1 = np.asarray(params["b1"], np.float32)
    b2 = np.asarray(params["b2"], np.float32)
    b3 = np.asarray(params["b3"], np.float32)
    w3 = np.asarray(params["w3"], np.float32).reshape(10, 10)   # [Cout, Cin]
    w3m = w3.T                                                  # [Cin, Cout]
    return {
        "w1t": _deconv_to_toeplitz(params["w1"], wp=12, wo=10),   # [3, 12*Cin, 160]
        "b1t": jnp.asarray(np.tile(b1, 10)[None, :]),             # [1, 160]
        "w2t": _deconv_to_toeplitz(params["w2"], wp=14, wo=12),   # [3, 224, 120]
        "b2t": jnp.asarray(np.tile(b2, 12)[None, :]),             # [1, 120]
        "w3t": jnp.asarray(np.kron(np.eye(12, dtype=np.float32), w3m)),  # [120, 120]
        "b3t": jnp.asarray(np.tile(b3, 12)[None, :]),             # [1, 120]
        "pool": jnp.asarray(np.tile(np.eye(10, dtype=np.float32), (12, 1)) / 144.0),
    }


# ---------------------------------------------------------------------------
# Forward wrapper: one fused pallas_call, grid over batch (parallel)
# ---------------------------------------------------------------------------
@jax.jit
def haptic_head_forward(x_nchw, prep):
    n, cin, h, w = x_nchw.shape
    assert (h, w) == (8, 8), "haptic_head expects an 8x8 spatial input"
    co1, wo1 = 16, 10
    co2, wo2 = 10, 12

    # NCHW -> [N, H, W*Cin] channel-interleaved rows (single tiny XLA transpose)
    x2d = jnp.transpose(x_nchw, (0, 2, 3, 1)).reshape(n, h, w * cin)
    x2d = x2d.astype(jnp.float32)

    out = pl.pallas_call(
        _fused_head_kernel,
        out_shape=jax.ShapeDtypeStruct((n, 1, 10), jnp.float32),
        grid=(n,),
        in_specs=[
            pl.BlockSpec((1, h, w * cin), lambda i: (i, 0, 0)),
            pl.BlockSpec((3, 12 * cin, wo1 * co1), lambda i: (0, 0, 0)),
            pl.BlockSpec((1, wo1 * co1), lambda i: (0, 0)),
            pl.BlockSpec((3, 14 * co1, wo2 * co2), lambda i: (0, 0, 0)),
            pl.BlockSpec((1, wo2 * co2), lambda i: (0, 0)),
            pl.BlockSpec((wo2 * co2, wo2 * co2), lambda i: (0, 0)),
            pl.BlockSpec((1, wo2 * co2), lambda i: (0, 0)),
            pl.BlockSpec((wo2 * co2, 10), lambda i: (0, 0)),
        ],
        out_specs=pl.BlockSpec((1, 1, 10), lambda i: (i, 0, 0)),
        scratch_shapes=[
            pltpu.VMEM((12, 12 * cin), jnp.float32),   # padded input canvas
            pltpu.VMEM((14, 14 * co1), jnp.float32),   # padded deconv1 canvas
        ],
        compiler_params=pltpu.CompilerParams(
            dimension_semantics=("parallel",)),
    )(x2d, prep["w1t"], prep["b1t"], prep["w2t"], prep["b2t"],
      prep["w3t"], prep["b3t"], prep["pool"])

    # Permute([0,2,3,1]): NCHW [N,10,1,1] -> [N,1,1,10]; channel-last result
    # already has that ordering.
    return out.reshape(n, 1, 1, 10)


# ---------------------------------------------------------------------------
# Pure-JAX reference (independent lax conv path) for verification
# ---------------------------------------------------------------------------
def _ref_forward(x_nchw, params):
    dn = ("NCHW", "OIHW", "NCHW")
    w1c = jnp.transpose(jnp.flip(params["w1"], (2, 3)), (1, 0, 2, 3))
    y = jax.lax.conv_general_dilated(x_nchw, w1c, (1, 1), [(2, 2), (2, 2)],
                                     dimension_numbers=dn)
    y = jax.nn.relu(y + params["b1"][None, :, None, None])
    w2c = jnp.transpose(jnp.flip(params["w2"], (2, 3)), (1, 0, 2, 3))
    y = jax.lax.conv_general_dilated(y, w2c, (1, 1), [(2, 2), (2, 2)],
                                     dimension_numbers=dn)
    y = jax.nn.relu(y + params["b2"][None, :, None, None])
    y = jax.lax.conv_general_dilated(y, params["w3"], (1, 1), "VALID",
                                     dimension_numbers=dn)
    y = jax.nn.relu(y + params["b3"][None, :, None, None])
    y = jnp.mean(y, axis=(2, 3), keepdims=True)       # AvgPool2d(12) on 12x12
    return jnp.transpose(y, (0, 2, 3, 1))


# ---------------------------------------------------------------------------
if __name__ == "__main__":
    in_channels = 4
    key = jax.random.PRNGKey(0)
    k1, k2, k3, k4, k5, k6, kx = jax.random.split(key, 7)

    params = {
        # torch shapes: ConvTranspose2d weight = [Cin, Cout, kH, kW]
        "w1": jax.random.normal(k1, (in_channels, 16, 3, 3), jnp.float32) * 0.1,
        "b1": jax.random.normal(k2, (16,), jnp.float32) * 0.1,
        "w2": jax.random.normal(k3, (16, 10, 3, 3), jnp.float32) * 0.1,
        "b2": jax.random.normal(k4, (10,), jnp.float32) * 0.1,
        # Conv2d weight = [Cout, Cin, 1, 1]
        "w3": jax.random.normal(k5, (10, 10, 1, 1), jnp.float32) * 0.1,
        "b3": jax.random.normal(k6, (10,), jnp.float32) * 0.1,
    }

    x = jax.random.normal(kx, (2, in_channels, 8, 8), jnp.float32)  # NCHW

    prep = prepare_params(params)          # one-time weight layout transform
    out = haptic_head_forward(x, prep)
    out = jax.block_until_ready(out)
    assert out.shape == (2, 1, 1, 10), out.shape

    ref = jax.block_until_ready(_ref_forward(x, params))
    assert jnp.allclose(out, ref, atol=1e-4, rtol=1e-4), (
        float(jnp.max(jnp.abs(out - ref))))

    print("KERNEL_OK")
</pallas_src>

<mosaic_0001>
module attributes {stable_mosaic.version = 11 : i64} {
  func.func @_fused_head_kernel(%arg0: i32, %arg1: memref<1x8x32xf32, #tpu.memory_space<vmem>>, %arg2: memref<3x48x160xf32, #tpu.memory_space<vmem>>, %arg3: memref<1x160xf32, #tpu.memory_space<vmem>>, %arg4: memref<3x224x120xf32, #tpu.memory_space<vmem>>, %arg5: memref<1x120xf32, #tpu.memory_space<vmem>>, %arg6: memref<120x120xf32, #tpu.memory_space<vmem>>, %arg7: memref<1x120xf32, #tpu.memory_space<vmem>>, %arg8: memref<120x10xf32, #tpu.memory_space<vmem>>, %arg9: memref<1x1x10xf32, #tpu.memory_space<vmem>>, %arg10: memref<12x48xf32, #tpu.memory_space<vmem>>, %arg11: memref<14x224xf32, #tpu.memory_space<vmem>>) attributes {dimension_semantics = [#tpu.dimension_semantics<parallel>], iteration_bounds = array<i64: 2>, scalar_prefetch = 0 : i64, scratch_operands = 2 : i64, tpu.core_type = #tpu.core_type<tc>, window_params = [{transform_indices = @transform_0, window_bounds = array<i64: 1, 8, 32>}, {pipeline_mode = #tpu.pipeline_mode<synchronous>, transform_indices = @transform_1, window_bounds = array<i64: 3, 48, 160>}, {pipeline_mode = #tpu.pipeline_mode<synchronous>, transform_indices = @transform_2, window_bounds = array<i64: 1, 160>}, {pipeline_mode = #tpu.pipeline_mode<synchronous>, transform_indices = @transform_3, window_bounds = array<i64: 3, 224, 120>}, {pipeline_mode = #tpu.pipeline_mode<synchronous>, transform_indices = @transform_4, window_bounds = array<i64: 1, 120>}, {pipeline_mode = #tpu.pipeline_mode<synchronous>, transform_indices = @transform_5, window_bounds = array<i64: 120, 120>}, {pipeline_mode = #tpu.pipeline_mode<synchronous>, transform_indices = @transform_6, window_bounds = array<i64: 1, 120>}, {pipeline_mode = #tpu.pipeline_mode<synchronous>, transform_indices = @transform_7, window_bounds = array<i64: 120, 10>}, {transform_indices = @transform_8, window_bounds = array<i64: 1, 1, 10>}]} {
    %cst = arith.constant 0.000000e+00 : f32
    %0 = vector.broadcast %cst : f32 to vector<12x48xf32>
    %c0 = arith.constant 0 : index
    %c0_0 = arith.constant 0 : index
    %1 = vector.load %arg10[%c0, %c0_0] : memref<12x48xf32, #tpu.memory_space<vmem>>, vector<12x48xf32>
    tpu.vector_store %arg10[%c0, %c0_0], %0 {strides = array<i32>} : memref<12x48xf32, #tpu.memory_space<vmem>>, vector<12x48xf32>,
    %cst_1 = arith.constant 0.000000e+00 : f32
    %2 = vector.broadcast %cst_1 : f32 to vector<14x224xf32>
    %c0_2 = arith.constant 0 : index
    %c0_3 = arith.constant 0 : index
    %3 = vector.load %arg11[%c0_2, %c0_3] : memref<14x224xf32, #tpu.memory_space<vmem>>, vector<14x224xf32>
    tpu.vector_store %arg11[%c0_2, %c0_3], %2 {strides = array<i32>} : memref<14x224xf32, #tpu.memory_space<vmem>>, vector<14x224xf32>,
    %c0_4 = arith.constant 0 : index
    %c0_5 = arith.constant 0 : index
    %c0_6 = arith.constant 0 : index
    %4 = vector.load %arg1[%c0_4, %c0_5, %c0_6] : memref<1x8x32xf32, #tpu.memory_space<vmem>>, vector<1x8x32xf32>
    %5 = vector.shape_cast %4 : vector<1x8x32xf32> to vector<8x32xf32>
    %c2 = arith.constant 2 : index
    %c8 = arith.constant 8 : index
    %6 = vector.load %arg10[%c2, %c8] : memref<12x48xf32, #tpu.memory_space<vmem>>, vector<8x32xf32>
    tpu.vector_store %arg10[%c2, %c8], %5 {strides = array<i32>} : memref<12x48xf32, #tpu.memory_space<vmem>>, vector<8x32xf32>,
    %c0_7 = arith.constant 0 : index
    %c0_8 = arith.constant 0 : index
    %7 = vector.load %arg10[%c0_7, %c0_8] : memref<12x48xf32, #tpu.memory_space<vmem>>, vector<10x48xf32>
    %c0_9 = arith.constant 0 : index
    %c0_10 = arith.constant 0 : index
    %c0_11 = arith.constant 0 : index
    %8 = vector.load %arg2[%c0_9, %c0_10, %c0_11] : memref<3x48x160xf32, #tpu.memory_space<vmem>>, vector<1x48x160xf32>
    %9 = vector.shape_cast %8 : vector<1x48x160xf32> to vector<48x160xf32>
    %cst_12 = arith.constant dense<0.000000e+00> : vector<10x160xf32>
    %10 = tpu.matmul %7, %9, %cst_12 {dimension_numbers = #tpu.dot_dimension_numbers<[1], [0], [0], [1], [0, 0, 1, 1], [], []>} : vector<10x48xf32>, vector<48x160xf32>, vector<10x160xf32> -> vector<10x160xf32>
    %c1 = arith.constant 1 : index
    %c0_13 = arith.constant 0 : index
    %11 = vector.load %arg10[%c1, %c0_13] : memref<12x48xf32, #tpu.memory_space<vmem>>, vector<10x48xf32>
    %c1_14 = arith.constant 1 : index
    %c0_15 = arith.constant 0 : index
    %c0_16 = arith.constant 0 : index
    %12 = vector.load %arg2[%c1_14, %c0_15, %c0_16] : memref<3x48x160xf32, #tpu.memory_space<vmem>>, vector<1x48x160xf32>
    %13 = vector.shape_cast %12 : vector<1x48x160xf32> to vector<48x160xf32>
    %cst_17 = arith.constant dense<0.000000e+00> : vector<10x160xf32>
    %14 = tpu.matmul %11, %13, %cst_17 {dimension_numbers = #tpu.dot_dimension_numbers<[1], [0], [0], [1], [0, 0, 1, 1], [], []>} : vector<10x48xf32>, vector<48x160xf32>, vector<10x160xf32> -> vector<10x160xf32>
    %15 = arith.addf %10, %14 : vector<10x160xf32>
    %c2_18 = arith.constant 2 : index
    %c0_19 = arith.constant 0 : index
    %16 = vector.load %arg10[%c2_18, %c0_19] : memref<12x48xf32, #tpu.memory_space<vmem>>, vector<10x48xf32>
    %c2_20 = arith.constant 2 : index
    %c0_21 = arith.constant 0 : index
    %c0_22 = arith.constant 0 : index
    %17 = vector.load %arg2[%c2_20, %c0_21, %c0_22] : memref<3x48x160xf32, #tpu.memory_space<vmem>>, vector<1x48x160xf32>
    %18 = vector.shape_cast %17 : vector<1x48x160xf32> to vector<48x160xf32>
    %cst_23 = arith.constant dense<0.000000e+00> : vector<10x160xf32>
    %19 = tpu.matmul %16, %18, %cst_23 {dimension_numbers = #tpu.dot_dimension_numbers<[1], [0], [0], [1], [0, 0, 1, 1], [], []>} : vector<10x48xf32>, vector<48x160xf32>, vector<10x160xf32> -> vector<10x160xf32>
    %20 = arith.addf %15, %19 : vector<10x160xf32>
    %c0_24 = arith.constant 0 : index
    %c0_25 = arith.constant 0 : index
    %21 = vector.load %arg3[%c0_24, %c0_25] : memref<1x160xf32, #tpu.memory_space<vmem>>, vector<1x160xf32>
    %22 = vector.broadcast %21 : vector<1x160xf32> to vector<10x160xf32>
    %23 = arith.addf %20, %22 : vector<10x160xf32>
    %cst_26 = arith.constant 0.000000e+00 : f32
    %24 = vector.broadcast %cst_26 : f32 to vector<10x160xf32>
    %25 = arith.maximumf %23, %24 : vector<10x160xf32>
    %c2_27 = arith.constant 2 : index
    %c32 = arith.constant 32 : index
    %26 = vector.load %arg11[%c2_27, %c32] : memref<14x224xf32, #tpu.memory_space<vmem>>, vector<10x160xf32>
    tpu.vector_store %arg11[%c2_27, %c32], %25 {strides = array<i32>} : memref<14x224xf32, #tpu.memory_space<vmem>>, vector<10x160xf32>,
    %c0_28 = arith.constant 0 : index
    %c0_29 = arith.constant 0 : index
    %27 = vector.load %arg11[%c0_28, %c0_29] : memref<14x224xf32, #tpu.memory_space<vmem>>, vector<12x224xf32>
    %c0_30 = arith.constant 0 : index
    %c0_31 = arith.constant 0 : index
    %c0_32 = arith.constant 0 : index
    %28 = vector.load %arg4[%c0_30, %c0_31, %c0_32] : memref<3x224x120xf32, #tpu.memory_space<vmem>>, vector<1x224x120xf32>
    %29 = vector.shape_cast %28 : vector<1x224x120xf32> to vector<224x120xf32>
    %cst_33 = arith.constant dense<0.000000e+00> : vector<12x120xf32>
    %30 = tpu.matmul %27, %29, %cst_33 {dimension_numbers = #tpu.dot_dimension_numbers<[1], [0], [0], [1], [0, 0, 1, 1], [], []>} : vector<12x224xf32>, vector<224x120xf32>, vector<12x120xf32> -> vector<12x120xf32>
    %c1_34 = arith.constant 1 : index
    %c0_35 = arith.constant 0 : index
    %31 = vector.load %arg11[%c1_34, %c0_35] : memref<14x224xf32, #tpu.memory_space<vmem>>, vector<12x224xf32>
    %c1_36 = arith.constant 1 : index
    %c0_37 = arith.constant 0 : index
    %c0_38 = arith.constant 0 : index
    %32 = vector.load %arg4[%c1_36, %c0_37, %c0_38] : memref<3x224x120xf32, #tpu.memory_space<vmem>>, vector<1x224x120xf32>
    %33 = vector.shape_cast %32 : vector<1x224x120xf32> to vector<224x120xf32>
    %cst_39 = arith.constant dense<0.000000e+00> : vector<12x120xf32>
    %34 = tpu.matmul %31, %33, %cst_39 {dimension_numbers = #tpu.dot_dimension_numbers<[1], [0], [0], [1], [0, 0, 1, 1], [], []>} : vector<12x224xf32>, vector<224x120xf32>, vector<12x120xf32> -> vector<12x120xf32>
    %35 = arith.addf %30, %34 : vector<12x120xf32>
    %c2_40 = arith.constant 2 : index
    %c0_41 = arith.constant 0 : index
    %36 = vector.load %arg11[%c2_40, %c0_41] : memref<14x224xf32, #tpu.memory_space<vmem>>, vector<12x224xf32>
    %c2_42 = arith.constant 2 : index
    %c0_43 = arith.constant 0 : index
    %c0_44 = arith.constant 0 : index
    %37 = vector.load %arg4[%c2_42, %c0_43, %c0_44] : memref<3x224x120xf32, #tpu.memory_space<vmem>>, vector<1x224x120xf32>
    %38 = vector.shape_cast %37 : vector<1x224x120xf32> to vector<224x120xf32>
    %cst_45 = arith.constant dense<0.000000e+00> : vector<12x120xf32>
    %39 = tpu.matmul %36, %38, %cst_45 {dimension_numbers = #tpu.dot_dimension_numbers<[1], [0], [0], [1], [0, 0, 1, 1], [], []>} : vector<12x224xf32>, vector<224x120xf32>, vector<12x120xf32> -> vector<12x120xf32>
    %40 = arith.addf %35, %39 : vector<12x120xf32>
    %c0_46 = arith.constant 0 : index
    %c0_47 = arith.constant 0 : index
    %41 = vector.load %arg5[%c0_46, %c0_47] : memref<1x120xf32, #tpu.memory_space<vmem>>, vector<1x120xf32>
    %42 = vector.broadcast %41 : vector<1x120xf32> to vector<12x120xf32>
    %43 = arith.addf %40, %42 : vector<12x120xf32>
    %cst_48 = arith.constant 0.000000e+00 : f32
    %44 = vector.broadcast %cst_48 : f32 to vector<12x120xf32>
    %45 = arith.maximumf %43, %44 : vector<12x120xf32>
    %c0_49 = arith.constant 0 : index
    %c0_50 = arith.constant 0 : index
    %46 = vector.load %arg6[%c0_49, %c0_50] : memref<120x120xf32, #tpu.memory_space<vmem>>, vector<120x120xf32>
    %cst_51 = arith.constant dense<0.000000e+00> : vector<12x120xf32>
    %47 = tpu.matmul %45, %46, %cst_51 {dimension_numbers = #tpu.dot_dimension_numbers<[1], [0], [0], [1], [0, 0, 1, 1], [], []>} : vector<12x120xf32>, vector<120x120xf32>, vector<12x120xf32> -> vector<12x120xf32>
    %c0_52 = arith.constant 0 : index
    %c0_53 = arith.constant 0 : index
    %48 = vector.load %arg7[%c0_52, %c0_53] : memref<1x120xf32, #tpu.memory_space<vmem>>, vector<1x120xf32>
    %49 = vector.broadcast %48 : vector<1x120xf32> to vector<12x120xf32>
    %50 = arith.addf %47, %49 : vector<12x120xf32>
    %cst_54 = arith.constant 0.000000e+00 : f32
    %51 = vector.broadcast %cst_54 : f32 to vector<12x120xf32>
    %52 = arith.maximumf %50, %51 : vector<12x120xf32>
    %c0_55 = arith.constant 0 : index
    %c0_56 = arith.constant 0 : index
    %53 = vector.load %arg8[%c0_55, %c0_56] : memref<120x10xf32, #tpu.memory_space<vmem>>, vector<120x10xf32>
    %cst_57 = arith.constant dense<0.000000e+00> : vector<12x10xf32>
    %54 = tpu.matmul %52, %53, %cst_57 {dimension_numbers = #tpu.dot_dimension_numbers<[1], [0], [0], [1], [0, 0, 1, 1], [], []>} : vector<12x120xf32>, vector<120x10xf32>, vector<12x10xf32> -> vector<12x10xf32>
    %cst_58 = arith.constant dense<0.000000e+00> : vector<10xf32>
    %55 = vector.multi_reduction <add>, %54, %cst_58 [0] : vector<12x10xf32> to vector<10xf32>
    %56 = vector.shape_cast %55 : vector<10xf32> to vector<1x10xf32>
    %c0_59 = arith.constant 0 : index
    %c0_60 = arith.constant 0 : index
    %c0_61 = arith.constant 0 : index
    %57 = vector.load %arg9[%c0_59, %c0_60, %c0_61] : memref<1x1x10xf32, #tpu.memory_space<vmem>>, vector<1x1x10xf32>
    %58 = vector.shape_cast %57 : vector<1x1x10xf32> to vector<1x10xf32>
    %59 = vector.shape_cast %56 : vector<1x10xf32> to vector<1x1x10xf32>
    tpu.vector_store %arg9[%c0_59, %c0_60, %c0_61], %59 {strides = array<i32>} : memref<1x1x10xf32, #tpu.memory_space<vmem>>, vector<1x1x10xf32>,
    return
  }
  func.func @transform_0(%arg0: i32) -> (i32, i32, i32) {
    %c0_i32 = arith.constant 0 : i32
    %c0_i32_0 = arith.constant 0 : i32
    %c0_i32_1 = arith.constant 0 : i32
    return %arg0, %c0_i32, %c0_i32_0 : i32, i32, i32
  }
  func.func @transform_1(%arg0: i32) -> (i32, i32, i32) {
    %c0_i32 = arith.constant 0 : i32
    %c0_i32_0 = arith.constant 0 : i32
    %c0_i32_1 = arith.constant 0 : i32
    %c0_i32_2 = arith.constant 0 : i32
    return %c0_i32, %c0_i32_0, %c0_i32_1 : i32, i32, i32
  }
  func.func @transform_2(%arg0: i32) -> (i32, i32) {
    %c0_i32 = arith.constant 0 : i32
    %c0_i32_0 = arith.constant 0 : i32
    %c0_i32_1 = arith.constant 0 : i32
    return %c0_i32, %c0_i32_0 : i32, i32
  }
  func.func @transform_3(%arg0: i32) -> (i32, i32, i32) {
    %c0_i32 = arith.constant 0 : i32
    %c0_i32_0 = arith.constant 0 : i32
    %c0_i32_1 = arith.constant 0 : i32
    %c0_i32_2 = arith.constant 0 : i32
    return %c0_i32, %c0_i32_0, %c0_i32_1 : i32, i32, i32
  }
  func.func @transform_4(%arg0: i32) -> (i32, i32) {
    %c0_i32 = arith.constant 0 : i32
    %c0_i32_0 = arith.constant 0 : i32
    %c0_i32_1 = arith.constant 0 : i32
    return %c0_i32, %c0_i32_0 : i32, i32
  }
  func.func @transform_5(%arg0: i32) -> (i32, i32) {
    %c0_i32 = arith.constant 0 : i32
    %c0_i32_0 = arith.constant 0 : i32
    %c0_i32_1 = arith.constant 0 : i32
    return %c0_i32, %c0_i32_0 : i32, i32
  }
  func.func @transform_6(%arg0: i32) -> (i32, i32) {
    %c0_i32 = arith.constant 0 : i32
    %c0_i32_0 = arith.constant 0 : i32
    %c0_i32_1 = arith.constant 0 : i32
    return %c0_i32, %c0_i32_0 : i32, i32
  }
  func.func @transform_7(%arg0: i32) -> (i32, i32) {
    %c0_i32 = arith.constant 0 : i32
    %c0_i32_0 = arith.constant 0 : i32
    %c0_i32_1 = arith.constant 0 : i32
    return %c0_i32, %c0_i32_0 : i32, i32
  }
  func.func @transform_8(%arg0: i32) -> (i32, i32, i32) {
    %c0_i32 = arith.constant 0 : i32
    %c0_i32_0 = arith.constant 0 : i32
    %c0_i32_1 = arith.constant 0 : i32
    return %arg0, %c0_i32, %c0_i32_0 : i32, i32, i32
  }
}

</mosaic_0001>

<llo_original>
// kernel: haptic_head_forward.1
$region0: #{haptic_head_forward.1}
  #allocation0 [shape = 'u32[]', space=smem, size = 0x4, offset = 0x4, fixed_abs, tag = 'smem constant byte address 0x4 - core index']
  #allocation1 [shape = 'u32[144,128]{1,0:T(1,128)}', space=vmem, size = 0x12000, scoped, tag = 'internal scratch']
  #allocation2 [shape = 'f32[12,48]{1,0:T(8,128)}', space=vmem, size = 0x2000, scoped, tag = 'scratch operand']
  #allocation3 [shape = 'f32[14,224]{1,0:T(8,128)}', space=vmem, size = 0x4000, scoped, tag = 'scratch operand']
  %s0 = inlined_call_operand.vmem [shape: f32[2,8,32], index: 0, kind: input, shape index: {}]
  %s1 = inlined_call_operand.vmem [shape: f32[3,48,160], index: 1, kind: input, shape index: {}]
  %s2 = inlined_call_operand.vmem [shape: f32[1,160], index: 2, kind: input, shape index: {}]
  %s3 = inlined_call_operand.hbm [shape: f32[3,224,120], index: 3, kind: input, shape index: {}]
  %s4 = inlined_call_operand.vmem [shape: f32[1,120], index: 4, kind: input, shape index: {}]
  %s5 = inlined_call_operand.hbm [shape: f32[120,120], index: 5, kind: input, shape index: {}]
  %s6 = inlined_call_operand.vmem [shape: f32[1,120], index: 6, kind: input, shape index: {}]
  %s7 = inlined_call_operand.vmem [shape: f32[120,10], index: 7, kind: input, shape index: {}]
  %s8 = inlined_call_operand.hbm [shape: f32[2,1,10], index: 8, kind: output, shape index: {}]
  %s9 = sld [smem:[#allocation0]]
  $region73: #{haptic_head_forward.1} parent=0
    _
  %s11 = ssub.s32 1, %s9
  %s12 = scalar_select 0, %s11, %s9
  $region1: #{haptic_head_forward.1} parent=0
    #allocation4 [shape = 'u8[344064]{0}', space=vmem, size = 0x54000, scoped, tag = 'input window, operand 3, single buffered']
    #allocation5 [shape = 's32[2]{0}', space=sflag, size = 0x8, scoped, tag = 'scoped memory for haptic_head_forward.1']
    #allocation6 [shape = 's32[2]{0}', space=sflag, size = 0x8, scoped, tag = 'scoped memory for haptic_head_forward.1']
    #allocation7 [shape = 'u8[61440]{0}', space=vmem, size = 0xf000, scoped, tag = 'input window, operand 5, single buffered']
    #allocation8 [shape = 's32[1]{0}', space=sflag, size = 0x4, scoped, tag = 'scoped memory for haptic_head_forward.1']
    #allocation9 [shape = 'u8[1024]{0}', space=vmem, size = 0x400, scoped, tag = 'output window, operand 0']
    %13 = vsyncpa [#allocation5], 0
    %14 = vsyncpa [#allocation8], 0
    %15 = vsyncpa [#allocation6], 0
    %s16 = scalar_lea.sflag [#allocation6], 1
    %17 = vsyncpa %s16, 0
    loop: start=0, step=1, limit=4
    $region2: #{haptic_head_forward.1} parent=1 // loop_pre_header
      _
    $region3: #{haptic_head_forward.1} parent=1 // loop_header
      %s19 = sphi 0, %s23
      %p20 = scmp.ge.s32.totalorder %s19, 4
      %s29 = sphi 0, %s31
      %s32 = sphi 0, %s29
      %s33 = sphi 0, %s32
      %s49 = sphi 0, %s33
      %s53 = sphi 0, %s53
      %s55 = sphi 0, %s53
      %s56 = sphi 0, %s55
      %s70 = sphi 0, %s56
      %s74 = sphi 0, %s74
      %s76 = sphi 0, %s74
      %s77 = sphi 0, %s76
      %s91 = sphi 0, %s77
      %s95 = sphi 0, %s95
      %s97 = sphi 0, %s95
      %s98 = sphi 0, %s97
      %s112 = sphi 0, %s98
      %s116 = sphi 0, %s116
      %s118 = sphi 0, %s116
      %s119 = sphi 0, %s118
      %s133 = sphi 0, %s119
      %s137 = sphi 0, %s137
      %s139 = sphi 0, %s137
      %s140 = sphi 0, %s139
      %s154 = sphi 0, %s140
      %s158 = sphi 0, %s158
      %s160 = sphi 0, %s158
      %s161 = sphi 0, %s160
      %s175 = sphi 0, %s161
      %s179 = sphi 0, %s179
      %s181 = sphi 0, %s179
      %s182 = sphi 0, %s181
      %s196 = sphi 0, %s182
      %s202 = sphi 0, %s204
      %s205 = sphi 0, %s202
      %s206 = sphi 0, %s205
      %s222 = sphi 0, %s206
    $region4: #{haptic_head_forward.1} parent=1 // loop_header_branch
      %22 = sbr.rel (%p20) target = $region8
    $region5: #{haptic_head_forward.1} parent=1 // loop_body
      %s24 = ssub.s32 %s19, 1
      %s25 = ssub.s32 %s19, 2
      %s26 = sadd.s32 %s19, 1
      %s27 = ssub.s32 %s19, %s26
      %p28 = scmp.eq.s32.totalorder %s27, 0
      %s30 = sadd.s32 %s29, 1
      %s31 = scalar_select %p28, %s29, %s30
      %p34 = pneg %p28
      %p35 = scmp.eq.s32.totalorder %s19, 1
      %p36 = por %p34, %p35
      %p37 = scmp.ne.s32.totalorder %s29, %s32
      %p38 = scmp.eq.s32.totalorder %s19, 0
      %p39 = por %p37, %p38
      %p40 = scmp.ne.s32.totalorder %s29, %s32
      %p41 = scmp.eq.s32.totalorder %s24, 1
      %p42 = por %p40, %p41
      %p43 = scmp.ne.s32.totalorder %s32, %s33
      %p44 = scmp.eq.s32.totalorder %s24, 0
      %p45 = por %p43, %p44
      %p46 = scmp.ne.s32.totalorder %s32, %s33
      %p47 = scmp.eq.s32.totalorder %s25, 1
      %p48 = por %p46, %p47
      %p50 = scmp.ne.s32.totalorder %s33, %s49
      %p51 = scmp.eq.s32.totalorder %s25, 0
      %p52 = por %p50, %p51
      %s54 = sadd.s32 %s53, 1
      %p57 = scmp.eq.s32.totalorder %s19, 1
      %p58 = scmp.ne.s32.totalorder %s53, %s55
      %p59 = scmp.eq.s32.totalorder %s19, 0
      %p60 = por %p58, %p59
      %p61 = scmp.ne.s32.totalorder %s53, %s55
      %p62 = scmp.eq.s32.totalorder %s24, 1
      %p63 = por %p61, %p62
      %p64 = scmp.ne.s32.totalorder %s55, %s56
      %p65 = scmp.eq.s32.totalorder %s24, 0
      %p66 = por %p64, %p65
      %p67 = scmp.ne.s32.totalorder %s55, %s56
      %p68 = scmp.eq.s32.totalorder %s25, 1
      %p69 = por %p67, %p68
      %p71 = scmp.ne.s32.totalorder %s56, %s70
      %p72 = scmp.eq.s32.totalorder %s25, 0
      %p73 = por %p71, %p72
      %s75 = sadd.s32 %s74, 1
      %p78 = scmp.eq.s32.totalorder %s19, 1
      %p79 = scmp.ne.s32.totalorder %s74, %s76
      %p80 = scmp.eq.s32.totalorder %s19, 0
      %p81 = por %p79, %p80
      %p82 = scmp.ne.s32.totalorder %s74, %s76
      %p83 = scmp.eq.s32.totalorder %s24, 1
      %p84 = por %p82, %p83
      %p85 = scmp.ne.s32.totalorder %s76, %s77
      %p86 = scmp.eq.s32.totalorder %s24, 0
      %p87 = por %p85, %p86
      %p88 = scmp.ne.s32.totalorder %s76, %s77
      %p89 = scmp.eq.s32.totalorder %s25, 1
      %p90 = por %p88, %p89
      %p92 = scmp.ne.s32.totalorder %s77, %s91
      %p93 = scmp.eq.s32.totalorder %s25, 0
      %p94 = por %p92, %p93
      %s96 = sadd.s32 %s95, 1
      %p99 = scmp.eq.s32.totalorder %s19, 1
      %p100 = scmp.ne.s32.totalorder %s95, %s97
      %p101 = scmp.eq.s32.totalorder %s19, 0
      %p102 = por %p100, %p101
      %p103 = scmp.ne.s32.totalorder %s95, %s97
      %p104 = scmp.eq.s32.totalorder %s24, 1
      %p105 = por %p103, %p104
      %p106 = scmp.ne.s32.totalorder %s97, %s98
      %p107 = scmp.eq.s32.totalorder %s24, 0
      %p108 = por %p106, %p107
      %p109 = scmp.ne.s32.totalorder %s97, %s98
      %p110 = scmp.eq.s32.totalorder %s25, 1
      %p111 = por %p109, %p110
      %p113 = scmp.ne.s32.totalorder %s98, %s112
      %p114 = scmp.eq.s32.totalorder %s25, 0
      %p115 = por %p113, %p114
      %s117 = sadd.s32 %s116, 1
      %p120 = scmp.eq.s32.totalorder %s19, 1
      %p121 = scmp.ne.s32.totalorder %s116, %s118
      %p122 = scmp.eq.s32.totalorder %s19, 0
      %p123 = por %p121, %p122
      %p124 = scmp.ne.s32.totalorder %s116, %s118
      %p125 = scmp.eq.s32.totalorder %s24, 1
      %p126 = por %p124, %p125
      %p127 = scmp.ne.s32.totalorder %s118, %s119
      %p128 = scmp.eq.s32.totalorder %s24, 0
      %p129 = por %p127, %p128
      %p130 = scmp.ne.s32.totalorder %s118, %s119
      %p131 = scmp.eq.s32.totalorder %s25, 1
      %p132 = por %p130, %p131
      %p134 = scmp.ne.s32.totalorder %s119, %s133
      %p135 = scmp.eq.s32.totalorder %s25, 0
      %p136 = por %p134, %p135
      %s138 = sadd.s32 %s137, 1
      %p141 = scmp.eq.s32.totalorder %s19, 1
      %p142 = scmp.ne.s32.totalorder %s137, %s139
      %p143 = scmp.eq.s32.totalorder %s19, 0
      %p144 = por %p142, %p143
      %p145 = scmp.ne.s32.totalorder %s137, %s139
      %p146 = scmp.eq.s32.totalorder %s24, 1
      %p147 = por %p145, %p146
      %p148 = scmp.ne.s32.totalorder %s139, %s140
      %p149 = scmp.eq.s32.totalorder %s24, 0
      %p150 = por %p148, %p149
      %p151 = scmp.ne.s32.totalorder %s139, %s140
      %p152 = scmp.eq.s32.totalorder %s25, 1
      %p153 = por %p151, %p152
      %p155 = scmp.ne.s32.totalorder %s140, %s154
      %p156 = scmp.eq.s32.totalorder %s25, 0
      %p157 = por %p155, %p156
      %s159 = sadd.s32 %s158, 1
      %p162 = scmp.eq.s32.totalorder %s19, 1
      %p163 = scmp.ne.s32.totalorder %s158, %s160
      %p164 = scmp.eq.s32.totalorder %s19, 0
      %p165 = por %p163, %p164
      %p166 = scmp.ne.s32.totalorder %s158, %s160
      %p167 = scmp.eq.s32.totalorder %s24, 1
      %p168 = por %p166, %p167
      %p169 = scmp.ne.s32.totalorder %s160, %s161
      %p170 = scmp.eq.s32.totalorder %s24, 0
      %p171 = por %p169, %p170
      %p172 = scmp.ne.s32.totalorder %s160, %s161
      %p173 = scmp.eq.s32.totalorder %s25, 1
      %p174 = por %p172, %p173
      %p176 = scmp.ne.s32.totalorder %s161, %s175
      %p177 = scmp.eq.s32.totalorder %s25, 0
      %p178 = por %p176, %p177
      %s180 = sadd.s32 %s179, 1
      %p183 = scmp.eq.s32.totalorder %s19, 1
      %p184 = scmp.ne.s32.totalorder %s179, %s181
      %p185 = scmp.eq.s32.totalorder %s19, 0
      %p186 = por %p184, %p185
      %p187 = scmp.ne.s32.totalorder %s179, %s181
      %p188 = scmp.eq.s32.totalorder %s24, 1
      %p189 = por %p187, %p188
      %p190 = scmp.ne.s32.totalorder %s181, %s182
      %p191 = scmp.eq.s32.totalorder %s24, 0
      %p192 = por %p190, %p191
      %p193 = scmp.ne.s32.totalorder %s181, %s182
      %p194 = scmp.eq.s32.totalorder %s25, 1
      %p195 = por %p193, %p194
      %p197 = scmp.ne.s32.totalorder %s182, %s196
      %p198 = scmp.eq.s32.totalorder %s25, 0
      %p199 = por %p197, %p198
      %s200 = ssub.s32 %s19, %s26
      %p201 = scmp.eq.s32.totalorder %s200, 0
      %s203 = sadd.s32 %s202, 1
      %s204 = scalar_select %p201, %s202, %s203
      %p207 = pneg %p201
      %p208 = scmp.eq.s32.totalorder %s19, 1
      %p209 = por %p207, %p208
      %p210 = scmp.ne.s32.totalorder %s202, %s205
      %p211 = scmp.eq.s32.totalorder %s19, 0
      %p212 = por %p210, %p211
      %p213 = scmp.ne.s32.totalorder %s202, %s205
      %p214 = scmp.eq.s32.totalorder %s24, 1
      %p215 = por %p213, %p214
      %p216 = scmp.ne.s32.totalorder %s205, %s206
      %p217 = scmp.eq.s32.totalorder %s24, 0
      %p218 = por %p216, %p217
      %p219 = scmp.ne.s32.totalorder %s205, %s206
      %p220 = scmp.eq.s32.totalorder %s25, 1
      %p221 = por %p219, %p220
      %p223 = scmp.ne.s32.totalorder %s206, %s222
      %p224 = scmp.eq.s32.totalorder %s25, 0
      %p225 = por %p223, %p224
      %p226 = scmp.le.s32.totalorder 1, %s19
      %p227 = scmp.lt.s32.totalorder %s19, 3
      %p228 = pnand %p226, %p227
      %p229 = pneg %p228
      // Predicated region
      $region9: #{haptic_head_forward.1} parent=5 // pred_check
        _
      $region10: #{haptic_head_forward.1} parent=5 // pred_check_branch
        %231 = sbr.rel (%p228) target = $region12
      $region11: #{haptic_head_forward.1} parent=5 // pred_region
        %s232 = ssub.s32 %s19, 1
        // Predicated region
        $region13: #{haptic_head_forward.1} parent=11 // pred_check
          %p233 = pneg %p66
        $region14: #{haptic_head_forward.1} parent=11 // pred_check_branch
          %235 = sbr.rel (%p233) target = $region16
        $region15: #{haptic_head_forward.1} parent=11 // pred_region
          _
        $region16: #{haptic_head_forward.1} parent=11 // pred_fallthru
          _
        // Predicated region
        $region17: #{haptic_head_forward.1} parent=11 // pred_check
          %p236 = pneg %p87
        $region18: #{haptic_head_forward.1} parent=11 // pred_check_branch
          %238 = sbr.rel (%p236) target = $region20
        $region19: #{haptic_head_forward.1} parent=11 // pred_region
          _
        $region20: #{haptic_head_forward.1} parent=11 // pred_fallthru
          _
        // Predicated region
        $region21: #{haptic_head_forward.1} parent=11 // pred_check
          %p239 = pneg %p108
        $region22: #{haptic_head_forward.1} parent=11 // pred_check_branch
          %241 = sbr.rel (%p239) target = $region24
        $region23: #{haptic_head_forward.1} parent=11 // pred_region
          %s243 = ssub.s32 10752, 10752
          %244 = vsyncadd [#allocation5], %s243
          %s245 = sshll.u32 [#allocation4], 4
          %s246 = int_to_ptr.vmem [resolvable:$true] %s245
          %251 = dma.hbm_to_vmem [thread:$0]  %s3, 10752, %s246, [#allocation5], 128, 128, 8
        $region24: #{haptic_head_forward.1} parent=11 // pred_fallthru
          _
        // Predicated region
        $region25: #{haptic_head_forward.1} parent=11 // pred_check
          %p252 = pneg %p129
        $region26: #{haptic_head_forward.1} parent=11 // pred_check_branch
          %254 = sbr.rel (%p252) target = $region28
        $region27: #{haptic_head_forward.1} parent=11 // pred_region
          _
        $region28: #{haptic_head_forward.1} parent=11 // pred_fallthru
          _
        // Predicated region
        $region29: #{haptic_head_forward.1} parent=11 // pred_check
          %p255 = pneg %p150
        $region30: #{haptic_head_forward.1} parent=11 // pred_check_branch
          %257 = sbr.rel (%p255) target = $region32
        $region31: #{haptic_head_forward.1} parent=11 // pred_region
          %s259 = ssub.s32 1920, 1920
          %260 = vsyncadd [#allocation8], %s259
          %s261 = sshll.u32 [#allocation7], 4
          %s262 = int_to_ptr.vmem [resolvable:$true] %s261
          %267 = dma.hbm_to_vmem [thread:$0]  %s5, 1920, %s262, [#allocation8], 128, 128, 8
        $region32: #{haptic_head_forward.1} parent=11 // pred_fallthru
          _
        // Predicated region
        $region33: #{haptic_head_forward.1} parent=11 // pred_check
          %p268 = pneg %p171
        $region34: #{haptic_head_forward.1} parent=11 // pred_check_branch
          %270 = sbr.rel (%p268) target = $region36
        $region35: #{haptic_head_forward.1} parent=11 // pred_region
          _
        $region36: #{haptic_head_forward.1} parent=11 // pred_fallthru
          _
        // Predicated region
        $region37: #{haptic_head_forward.1} parent=11 // pred_check
          %p271 = pneg %p192
        $region38: #{haptic_head_forward.1} parent=11 // pred_check_branch
          %273 = sbr.rel (%p271) target = $region40
        $region39: #{haptic_head_forward.1} parent=11 // pred_region
          _
        $region40: #{haptic_head_forward.1} parent=11 // pred_fallthru
          _
      $region12: #{haptic_head_forward.1} parent=5 // pred_fallthru
        _
      %p274 = scmp.lt.s32.totalorder %s19, 2
      // Predicated region
      $region41: #{haptic_head_forward.1} parent=5 // pred_check
        %p275 = pneg %p274
      $region42: #{haptic_head_forward.1} parent=5 // pred_check_branch
        %277 = sbr.rel (%p275) target = $region44
      $region43: #{haptic_head_forward.1} parent=5 // pred_region
        // Predicated region
        $region45: #{haptic_head_forward.1} parent=43 // pred_check
          %p278 = pneg %p39
        $region46: #{haptic_head_forward.1} parent=43 // pred_check_branch
          %280 = sbr.rel (%p278) target = $region48
        $region47: #{haptic_head_forward.1} parent=43 // pred_region
          %p281 = scmp.lt.s32.totalorder %s19, 1
          %s282 = scalar_select %p281, %s19, 1
          %s283 = smul.addr %s282, 8
          %s284 = scalar_lea.vmem %s0, %s283
        $region48: #{haptic_head_forward.1} parent=43 // pred_fallthru
          _
      $region44: #{haptic_head_forward.1} parent=5 // pred_fallthru
        _
      %p285 = scmp.le.s32.totalorder 1, %s19
      %p286 = scmp.lt.s32.totalorder %s19, 3
      %p287 = pnand %p285, %p286
      %p288 = pneg %p287
      // Predicated region
      $region49: #{haptic_head_forward.1} parent=5 // pred_check
        _
      $region50: #{haptic_head_forward.1} parent=5 // pred_check_branch
        %290 = sbr.rel (%p287) target = $region52
      $region51: #{haptic_head_forward.1} parent=5 // pred_region
        %s291 = ssub.s32 %s19, 1
        // Predicated region
        $region53: #{haptic_head_forward.1} parent=51 // pred_check
          %p292 = pneg %p108
        $region54: #{haptic_head_forward.1} parent=51 // pred_check_branch
          %294 = sbr.rel (%p292) target = $region56
        $region55: #{haptic_head_forward.1} parent=51 // pred_region
          %295 = dma.done [#allocation5], 10752
        $region56: #{haptic_head_forward.1} parent=51 // pred_fallthru
          _
        // Predicated region
        $region57: #{haptic_head_forward.1} parent=51 // pred_check
          %p296 = pneg %p150
        $region58: #{haptic_head_forward.1} parent=51 // pred_check_branch
          %298 = sbr.rel (%p296) target = $region60
        $region59: #{haptic_head_forward.1} parent=51 // pred_region
          %299 = dma.done [#allocation8], 1920
        $region60: #{haptic_head_forward.1} parent=51 // pred_fallthru
          _
        %p300 = scmp.lt.s32.totalorder %s24, 1
        %s301 = scalar_select %p300, %s24, 1
        %s302 = smul.addr %s301, 8
        %s303 = scalar_lea.vmem %s0, %s302
        %p304 = pneg %p45
        %p305 = pneg %p42
        %p306 = pneg %p66
        %p307 = pneg %p63
        %p308 = pneg %p87
        %p309 = pneg %p84
        %p310 = pneg %p108
        %p311 = pneg %p105
        %p312 = pneg %p129
        %p313 = pneg %p126
        %p314 = pneg %p150
        %p315 = pneg %p147
        %p316 = pneg %p171
        %p317 = pneg %p168
        %p318 = pneg %p192
        %p319 = pneg %p189
        %p320 = pneg %p218
        %p321 = pneg %p215
        %s322 = sand.u32 %s205, 1
        %s323 = scalar_lea.sflag [#allocation6], %s322
        %s324 = sand.u32 %s205, 1
        %s325 = scalar_lea.vmem [#allocation9], %s324
        %p326 = scmp.lt.s32.totalorder %s24, 1
        %s327 = scalar_select %p326, %s24, 1
        %s328 = smul.addr %s327, 8
        %s329 = scalar_lea.vmem %s0, %s328
        %vm330 = vcmask 392192
        %331 = vst.msk [vmem:[#allocation2] sm:$0xff] %vm330, 0.0
        %vm332 = vcmask 388096
        %333 = vst.msk [vmem:[#allocation2 + $0x8] sm:$0xf] %vm332, 0.0
        %334 = vst [vmem:[#allocation3] sm:$0xff] 0.0
        %vm335 = vcmask 785408
        %336 = vst.msk [vmem:[#allocation3 + $0x8] sm:$0xff] %vm335, 0.0
        %337 = vst [vmem:[#allocation3 + $0x10] sm:$0x3f] 0.0
        %vm338 = vcmask 783360
        %339 = vst.msk [vmem:[#allocation3 + $0x18] sm:$0x3f] %vm338, 0.0
        %v340 = vld [vmem:[%s329] sm:$0xff]
        %342 = vrot.lane.b32.xlu0 %v340, 8
        %v343 = vpop.permute.xlu0 %342
        %vm345 = vcmask 326720
        %346 = vst.msk [vmem:[#allocation2 + $0x2] sm:$0xff] %vm345, %v343
        %v347 = vld [vmem:[#allocation2] sm:$0xff]
        %v348 = vld [vmem:[#allocation2 + $0x8] sm:$0x3]
        %v349 = vld [vmem:[%s1] sm:$0xff]
        %v350 = vld [vmem:[%s1 + $0x8] sm:$0xff]
        %v351 = vld [vmem:[%s1 + $0x10] sm:$0xff]
        %v352 = vld [vmem:[%s1 + $0x18] sm:$0xff]
        %v353 = vld [vmem:[%s1 + $0x20] sm:$0xff]
        %v354 = vld [vmem:[%s1 + $0x28] sm:$0xff]
        %v355 = vld [vmem:[%s1 + $0x30] sm:$0xff]
        %v356 = vld [vmem:[%s1 + $0x38] sm:$0xff]
        %v357 = vld [vmem:[%s1 + $0x40] sm:$0xff]
        %v358 = vld [vmem:[%s1 + $0x48] sm:$0xff]
        %v359 = vld [vmem:[%s1 + $0x50] sm:$0xff]
        %v360 = vld [vmem:[%s1 + $0x58] sm:$0xff]
        %v361 = vld [vmem:[#allocation2 + $0x1] sm:$0xff]
        %v362 = vld [vmem:[#allocation2 + $0x9] sm:$0x3]
        %s363 = scalar_lea.vmem %s1, 96
        %v364 = vld [vmem:[%s363] sm:$0xff]
        %v365 = vld [vmem:[%s363 + $0x8] sm:$0xff]
        %v366 = vld [vmem:[%s363 + $0x10] sm:$0xff]
        %v367 = vld [vmem:[%s363 + $0x18] sm:$0xff]
        %v368 = vld [vmem:[%s363 + $0x20] sm:$0xff]
        %v369 = vld [vmem:[%s363 + $0x28] sm:$0xff]
        %v370 = vld [vmem:[%s363 + $0x30] sm:$0xff]
        %v371 = vld [vmem:[%s363 + $0x38] sm:$0xff]
        %v372 = vld [vmem:[%s363 + $0x40] sm:$0xff]
        %v373 = vld [vmem:[%s363 + $0x48] sm:$0xff]
        %v374 = vld [vmem:[%s363 + $0x50] sm:$0xff]
        %v375 = vld [vmem:[%s363 + $0x58] sm:$0xff]
        %v377 = vsel %vm330, %v361, 0
        %v380 = vsel %vm330, %v362, 0
        %382 = vmatprep.subr.mxu0 %v365
        %383 = vmatpush1.msra.mxu0 %v364
        %384 = vmatprep.subr.mxu0 %v367
        %385 = vmatpush1.msra.mxu0 %v366
        %386 = vmatprep.subr.mxu0 %v369
        %387 = vmatpush1.msra.mxu0 %v368
        %388 = vmatprep.subr.mxu0 %v371
        %389 = vmatpush1.msra.mxu0 %v370
        %390 = vmatprep.subr.mxu0 %v373
        %391 = vmatpush1.msra.mxu0 %v372
        %392 = vmatprep.subr.mxu0 %v375
        %393 = vmatpush1.msra.mxu0 %v374
        %394 = vmatprep.subr.mxu0 0.0
        %395 = vmatpush1.msra.mxu0 0.0
        %396 = vmatprep.subr.mxu0 0.0
        %397 = vmatpush1.msra.mxu0 0.0
        %398 = vmatprep.subr.mxu0 0.0
        %399 = vmatpush1.msra.mxu0 0.0
        %400 = vmatprep.subr.mxu0 0.0
        %401 = vmatpush1.msra.mxu0 0.0
        %402 = vmatprep.subr.mxu0 0.0
        %403 = vmatpush1.msra.mxu0 0.0
        %404 = vmatprep.subr.mxu0 0.0
        %405 = vmatpush1.msra.mxu0 0.0
        %406 = vmatprep.subr.mxu0 0.0
        %407 = vmatpush1.msra.mxu0 0.0
        %408 = vmatprep.subr.mxu0 0.0
        %409 = vmatpush1.msra.mxu0 0.0
        %410 = vmatprep.subr.mxu0 0.0
        %411 = vmatpush1.msra.mxu0 0.0
        %412 = vmatprep.subr.mxu0 0.0
        %413 = vmatpush1.msra.mxu0 0.0
        %414 = vmatprep.subr.mxu0 0.0
        %415 = vmatpush1.msra.mxu0 0.0
        %416 = vmatprep.subr.mxu0 0.0
        %417 = vmatpush1.msra.mxu0 0.0
        %418 = vmatprep.subr.mxu0 0.0
        %419 = vmatpush1.msra.mxu0 0.0
        %420 = vmatprep.subr.mxu0 0.0
        %421 = vmatpush1.msra.mxu0 0.0
        %422 = vmatprep.subr.mxu0 0.0
        %423 = vmatpush1.msra.mxu0 0.0
        %424 = vmatprep.subr.mxu0 0.0
        %425 = vmatpush1.msra.mxu0 0.0
        %426 = vmatprep.subr.mxu0 0.0
        %427 = vmatpush1.msra.mxu0 0.0
        %428 = vmatprep.subr.mxu0 0.0
        %429 = vmatpush1.msra.mxu0 0.0
        %430 = vmatprep.subr.mxu0 0.0
        %431 = vmatpush1.msra.mxu0 0.0
        %432 = vmatprep.subr.mxu0 0.0
        %433 = vmatpush1.msra.mxu0 0.0
        %434 = vmatprep.subr.mxu0 0.0
        %435 = vmatpush1.msra.mxu0 0.0
        %436 = vmatprep.subr.mxu0 0.0
        %437 = vmatpush1.msra.mxu0 0.0
        %438 = vmatprep.subr.mxu0 0.0
        %439 = vmatpush1.msra.mxu0 0.0
        %440 = vmatprep.subr.mxu0 0.0
        %441 = vmatpush1.msra.mxu0 0.0
        %442 = vmatprep.subr.mxu0 0.0
        %443 = vmatpush1.msra.mxu0 0.0
        %444 = vmatprep.subr.mxu0 0.0
        %445 = vmatpush1.msra.mxu0 0.0
        %446 = vmatprep.mubr.f32.mxu0 0.0
        %447 = vmatmul.mubr.f32.gmra.mrb[0].mxu0 %v377
        %v448 = vpop.f32.mrb[0].mxu0
        %v449 = vadd.f32 0.0, %v448
        %v450 = vpop.f32.mrb[0].mxu0
        %v451 = vadd.f32 0.0, %v450
        %452 = vmatprep.mubr.f32.mxu0 0.0
        %453 = vmatmul.mubr.f32.gmra.mrb[0].mxu0 %v380
        %v454 = vpop.f32.mrb[0].mxu0
        %v455 = vadd.f32 0.0, %v454
        %v456 = vpop.f32.mrb[0].mxu0
        %v457 = vadd.f32 0.0, %v456
        %458 = vdwg.mxu0
        %v460 = vsel %vm330, %v347, 0
        %v463 = vsel %vm330, %v348, 0
        %465 = vmatprep.subr.mxu0 %v350
        %466 = vmatpush1.msra.mxu0 %v349
        %467 = vmatprep.subr.mxu0 %v352
        %468 = vmatpush1.msra.mxu0 %v351
        %469 = vmatprep.subr.mxu0 %v354
        %470 = vmatpush1.msra.mxu0 %v353
        %471 = vmatprep.subr.mxu0 %v356
        %472 = vmatpush1.msra.mxu0 %v355
        %473 = vmatprep.subr.mxu0 %v358
        %474 = vmatpush1.msra.mxu0 %v357
        %475 = vmatprep.subr.mxu0 %v360
        %476 = vmatpush1.msra.mxu0 %v359
        %477 = vmatprep.subr.mxu0 0.0
        %478 = vmatpush1.msra.mxu0 0.0
        %479 = vmatprep.subr.mxu0 0.0
        %480 = vmatpush1.msra.mxu0 0.0
        %481 = vmatprep.subr.mxu0 0.0
        %482 = vmatpush1.msra.mxu0 0.0
        %483 = vmatprep.subr.mxu0 0.0
        %484 = vmatpush1.msra.mxu0 0.0
        %485 = vmatprep.subr.mxu0 0.0
        %486 = vmatpush1.msra.mxu0 0.0
        %487 = vmatprep.subr.mxu0 0.0
        %488 = vmatpush1.msra.mxu0 0.0
        %489 = vmatprep.subr.mxu0 0.0
        %490 = vmatpush1.msra.mxu0 0.0
        %491 = vmatprep.subr.mxu0 0.0
        %492 = vmatpush1.msra.mxu0 0.0
        %493 = vmatprep.subr.mxu0 0.0
        %494 = vmatpush1.msra.mxu0 0.0
        %495 = vmatprep.subr.mxu0 0.0
        %496 = vmatpush1.msra.mxu0 0.0
        %497 = vmatprep.subr.mxu0 0.0
        %498 = vmatpush1.msra.mxu0 0.0
        %499 = vmatprep.subr.mxu0 0.0
        %500 = vmatpush1.msra.mxu0 0.0
        %501 = vmatprep.subr.mxu0 0.0
        %502 = vmatpush1.msra.mxu0 0.0
        %503 = vmatprep.subr.mxu0 0.0
        %504 = vmatpush1.msra.mxu0 0.0
        %505 = vmatprep.subr.mxu0 0.0
        %506 = vmatpush1.msra.mxu0 0.0
        %507 = vmatprep.subr.mxu0 0.0
        %508 = vmatpush1.msra.mxu0 0.0
        %509 = vmatprep.subr.mxu0 0.0
        %510 = vmatpush1.msra.mxu0 0.0
        %511 = vmatprep.subr.mxu0 0.0
        %512 = vmatpush1.msra.mxu0 0.0
        %513 = vmatprep.subr.mxu0 0.0
        %514 = vmatpush1.msra.mxu0 0.0
        %515 = vmatprep.subr.mxu0 0.0
        %516 = vmatpush1.msra.mxu0 0.0
        %517 = vmatprep.subr.mxu0 0.0
        %518 = vmatpush1.msra.mxu0 0.0
        %519 = vmatprep.subr.mxu0 0.0
        %520 = vmatpush1.msra.mxu0 0.0
        %521 = vmatprep.subr.mxu0 0.0
        %522 = vmatpush1.msra.mxu0 0.0
        %523 = vmatprep.subr.mxu0 0.0
        %524 = vmatpush1.msra.mxu0 0.0
        %525 = vmatprep.subr.mxu0 0.0
        %526 = vmatpush1.msra.mxu0 0.0
        %527 = vmatprep.subr.mxu0 0.0
        %528 = vmatpush1.msra.mxu0 0.0
        %529 = vmatprep.mubr.f32.mxu0 0.0
        %530 = vmatmul.mubr.f32.gmra.mrb[0].mxu0 %v460
        %v531 = vpop.f32.mrb[0].mxu0
        %v532 = vadd.f32 %v449, %v531
        %v533 = vpop.f32.mrb[0].mxu0
        %v534 = vadd.f32 %v451, %v533
        %535 = vmatprep.mubr.f32.mxu0 0.0
        %536 = vmatmul.mubr.f32.gmra.mrb[0].mxu0 %v463
        %v537 = vpop.f32.mrb[0].mxu0
        %v538 = vadd.f32 %v455, %v537
        %v539 = vpop.f32.mrb[0].mxu0
        %v540 = vadd.f32 %v457, %v539
        %541 = vdwg.mxu0
        %v542 = vld [vmem:[#allocation2 + $0x2] sm:$0xff]
        %v543 = vld [vmem:[#allocation2 + $0xa] sm:$0x3]
        %s544 = scalar_lea.vmem %s1, 192
        %v545 = vld [vmem:[%s544] sm:$0xff]
        %v546 = vld [vmem:[%s544 + $0x8] sm:$0xff]
        %v547 = vld [vmem:[%s544 + $0x10] sm:$0xff]
        %v548 = vld [vmem:[%s544 + $0x18] sm:$0xff]
        %v549 = vld [vmem:[%s544 + $0x20] sm:$0xff]
        %v550 = vld [vmem:[%s544 + $0x28] sm:$0xff]
        %v551 = vld [vmem:[%s544 + $0x30] sm:$0xff]
        %v552 = vld [vmem:[%s544 + $0x38] sm:$0xff]
        %v553 = vld [vmem:[%s544 + $0x40] sm:$0xff]
        %v554 = vld [vmem:[%s544 + $0x48] sm:$0xff]
        %v555 = vld [vmem:[%s544 + $0x50] sm:$0xff]
        %v556 = vld [vmem:[%s544 + $0x58] sm:$0xff]
        %v558 = vsel %vm330, %v542, 0
        %v561 = vsel %vm330, %v543, 0
        %563 = vmatprep.subr.mxu0 %v546
        %564 = vmatpush1.msra.mxu0 %v545
        %565 = vmatprep.subr.mxu0 %v548
        %566 = vmatpush1.msra.mxu0 %v547
        %567 = vmatprep.subr.mxu0 %v550
        %568 = vmatpush1.msra.mxu0 %v549
        %569 = vmatprep.subr.mxu0 %v552
        %570 = vmatpush1.msra.mxu0 %v551
        %571 = vmatprep.subr.mxu0 %v554
        %572 = vmatpush1.msra.mxu0 %v553
        %573 = vmatprep.subr.mxu0 %v556
        %574 = vmatpush1.msra.mxu0 %v555
        %575 = vmatprep.subr.mxu0 0.0
        %576 = vmatpush1.msra.mxu0 0.0
        %577 = vmatprep.subr.mxu0 0.0
        %578 = vmatpush1.msra.mxu0 0.0
        %579 = vmatprep.subr.mxu0 0.0
        %580 = vmatpush1.msra.mxu0 0.0
        %581 = vmatprep.subr.mxu0 0.0
        %582 = vmatpush1.msra.mxu0 0.0
        %583 = vmatprep.subr.mxu0 0.0
        %584 = vmatpush1.msra.mxu0 0.0
        %585 = vmatprep.subr.mxu0 0.0
        %586 = vmatpush1.msra.mxu0 0.0
        %587 = vmatprep.subr.mxu0 0.0
        %588 = vmatpush1.msra.mxu0 0.0
        %589 = vmatprep.subr.mxu0 0.0
        %590 = vmatpush1.msra.mxu0 0.0
        %591 = vmatprep.subr.mxu0 0.0
        %592 = vmatpush1.msra.mxu0 0.0
        %593 = vmatprep.subr.mxu0 0.0
        %594 = vmatpush1.msra.mxu0 0.0
        %595 = vmatprep.subr.mxu0 0.0
        %596 = vmatpush1.msra.mxu0 0.0
        %597 = vmatprep.subr.mxu0 0.0
        %598 = vmatpush1.msra.mxu0 0.0
        %599 = vmatprep.subr.mxu0 0.0
        %600 = vmatpush1.msra.mxu0 0.0
        %601 = vmatprep.subr.mxu0 0.0
        %602 = vmatpush1.msra.mxu0 0.0
        %603 = vmatprep.subr.mxu0 0.0
        %604 = vmatpush1.msra.mxu0 0.0
        %605 = vmatprep.subr.mxu0 0.0
        %606 = vmatpush1.msra.mxu0 0.0
        %607 = vmatprep.subr.mxu0 0.0
        %608 = vmatpush1.msra.mxu0 0.0
        %609 = vmatprep.subr.mxu0 0.0
        %610 = vmatpush1.msra.mxu0 0.0
        %611 = vmatprep.subr.mxu0 0.0
        %612 = vmatpush1.msra.mxu0 0.0
        %613 = vmatprep.subr.mxu0 0.0
        %614 = vmatpush1.msra.mxu0 0.0
        %615 = vmatprep.subr.mxu0 0.0
        %616 = vmatpush1.msra.mxu0 0.0
        %617 = vmatprep.subr.mxu0 0.0
        %618 = vmatpush1.msra.mxu0 0.0
        %619 = vmatprep.subr.mxu0 0.0
        %620 = vmatpush1.msra.mxu0 0.0
        %621 = vmatprep.subr.mxu0 0.0
        %622 = vmatpush1.msra.mxu0 0.0
        %623 = vmatprep.subr.mxu0 0.0
        %624 = vmatpush1.msra.mxu0 0.0
        %625 = vmatprep.subr.mxu0 0.0
        %626 = vmatpush1.msra.mxu0 0.0
        %627 = vmatprep.mubr.f32.mxu0 0.0
        %628 = vmatmul.mubr.f32.gmra.mrb[0].mxu0 %v558
        %v629 = vpop.f32.mrb[0].mxu0
        %v630 = vadd.f32 0.0, %v629
        %v631 = vpop.f32.mrb[0].mxu0
        %v632 = vadd.f32 0.0, %v631
        %633 = vmatprep.mubr.f32.mxu0 0.0
        %634 = vmatmul.mubr.f32.gmra.mrb[0].mxu0 %v561
        %v635 = vpop.f32.mrb[0].mxu0
        %v636 = vadd.f32 0.0, %v635
        %v637 = vpop.f32.mrb[0].mxu0
        %v638 = vadd.f32 0.0, %v637
        %639 = vdwg.mxu0
        %v640 = vadd.f32 %v532, %v630
        %v641 = vadd.f32 %v534, %v632
        %v642 = vadd.f32 %v538, %v636
        %v643 = vadd.f32 %v540, %v638
        %v644 = vld [vmem:[%s2] sm:$0x3]
        %v646 = vlaneseq
        %v647 = vshrl.u32 %v646, 7
        %v648 = vsub.s32 0, %v647
        %v649 = vrot.slane %v644, %v648
        %v650 = vlaneseq
        %v651 = vshrl.u32 %v650, 7
        %v652 = vsub.s32 1, %v651
        %v653 = vrot.slane %v644, %v652
        %v656 = vadd.f32 %v640, %v649
        %v657 = vadd.f32 %v641, %v653
        %v658 = vadd.f32 %v642, %v649
        %v659 = vadd.f32 %v643, %v653
        %v660 = vmax.f32 %v656, 0.0
        %v661 = vmax.f32 %v657, 0.0
        %v662 = vmax.f32 %v658, 0.0
        %v663 = vmax.f32 %v659, 0.0
        %vm668 = vcmask 1041408
        %v669 = vrot.slane %v660, 6
        %v670 = vrot.slane %v661, 6
        %v671 = vrot.slane %v662, 6
        %v672 = vsel %vm668, %v669, %v671
        %v673 = vrot.slane %v663, 6
        %v674 = vsel %vm668, %v670, %v673
        %675 = vrot.lane.b32.xlu0 %v669, 32
        %v676 = vpop.permute.xlu0 %675
        %677 = vrot.lane.b32.xlu0 %v670, 32
        %v678 = vpop.permute.xlu0 %677
        %679 = vrot.lane.b32.xlu0 %v672, 32
        %v680 = vpop.permute.xlu0 %679
        %681 = vrot.lane.b32.xlu0 %v674, 32
        %v682 = vpop.permute.xlu0 %681
        %vm683 = vcmask 261120
        %v684 = vsel %vm683, %v676, %v678
        %v685 = vsel %vm683, %v680, %v682
        %vm690 = vcmask 1047810
        %691 = vst.msk [vmem:[#allocation3] sm:$0xfc] %vm690, %v676
        %vm692 = vcmask 523266
        %693 = vst.msk [vmem:[#allocation3 + $0x8] sm:$0xfc] %vm692, %v684
        %vm694 = vcmask 1043712
        %695 = vst.msk [vmem:[#allocation3 + $0x10] sm:$0xf] %vm694, %v680
        %vm696 = vcmask 519168
        %697 = vst.msk [vmem:[#allocation3 + $0x18] sm:$0xf] %vm696, %v685
        %v698 = vld [vmem:[#allocation3] sm:$0xff]
        %v699 = vld [vmem:[#allocation3 + $0x8] sm:$0xff]
        %v700 = vld [vmem:[#allocation3 + $0x10] sm:$0xf]
        %v701 = vld [vmem:[#allocation3 + $0x18] sm:$0xf]
        %v702 = vld [vmem:[#allocation4] sm:$0xff]
        %v703 = vld [vmem:[#allocation4 + $0x8] sm:$0xff]
        %v704 = vld [vmem:[#allocation4 + $0x10] sm:$0xff]
        %v705 = vld [vmem:[#allocation4 + $0x18] sm:$0xff]
        %v706 = vld [vmem:[#allocation4 + $0x20] sm:$0xff]
        %v707 = vld [vmem:[#allocation4 + $0x28] sm:$0xff]
        %v708 = vld [vmem:[#allocation4 + $0x30] sm:$0xff]
        %v709 = vld [vmem:[#allocation4 + $0x38] sm:$0xff]
        %v710 = vld [vmem:[#allocation4 + $0x40] sm:$0xff]
        %v711 = vld [vmem:[#allocation4 + $0x48] sm:$0xff]
        %v712 = vld [vmem:[#allocation4 + $0x50] sm:$0xff]
        %v713 = vld [vmem:[#allocation4 + $0x58] sm:$0xff]
        %v714 = vld [vmem:[#allocation4 + $0x60] sm:$0xff]
        %v715 = vld [vmem:[#allocation4 + $0x68] sm:$0xff]
        %v716 = vld [vmem:[#allocation4 + $0x70] sm:$0xff]
        %v717 = vld [vmem:[#allocation4 + $0x78] sm:$0xff]
        %v718 = vld [vmem:[#allocation4 + $0x80] sm:$0xff]
        %v719 = vld [vmem:[#allocation4 + $0x88] sm:$0xff]
        %v720 = vld [vmem:[#allocation4 + $0x90] sm:$0xff]
        %v721 = vld [vmem:[#allocation4 + $0x98] sm:$0xff]
        %v722 = vld [vmem:[#allocation4 + $0xa0] sm:$0xff]
        %v723 = vld [vmem:[#allocation4 + $0xa8] sm:$0xff]
        %v724 = vld [vmem:[#allocation4 + $0xb0] sm:$0xff]
        %v725 = vld [vmem:[#allocation4 + $0xb8] sm:$0xff]
        %v726 = vld [vmem:[#allocation4 + $0xc0] sm:$0xff]
        %v727 = vld [vmem:[#allocation4 + $0xc8] sm:$0xff]
        %v728 = vld [vmem:[#allocation4 + $0xd0] sm:$0xff]
        %v729 = vld [vmem:[#allocation4 + $0xd8] sm:$0xff]
        %v730 = vld [vmem:[#allocation3] sm:$0xfe]
        %v731 = vld [vmem:[#allocation3 + $0x8] sm:$0xfe]
        %v732 = vld [vmem:[#allocation3 + $0x10] sm:$0x1f]
        %v733 = vld [vmem:[#allocation3 + $0x18] sm:$0x1f]
        %s734 = scalar_lea.vmem [#allocation4], 224
        %v735 = vld [vmem:[%s734] sm:$0xff]
        %v736 = vld [vmem:[%s734 + $0x8] sm:$0xff]
        %v737 = vld [vmem:[%s734 + $0x10] sm:$0xff]
        %v738 = vld [vmem:[%s734 + $0x18] sm:$0xff]
        %v739 = vld [vmem:[%s734 + $0x20] sm:$0xff]
        %v740 = vld [vmem:[%s734 + $0x28] sm:$0xff]
        %v741 = vld [vmem:[%s734 + $0x30] sm:$0xff]
        %v742 = vld [vmem:[%s734 + $0x38] sm:$0xff]
        %v743 = vld [vmem:[%s734 + $0x40] sm:$0xff]
        %v744 = vld [vmem:[%s734 + $0x48] sm:$0xff]
        %v745 = vld [vmem:[%s734 + $0x50] sm:$0xff]
        %v746 = vld [vmem:[%s734 + $0x58] sm:$0xff]
        %v747 = vld [vmem:[%s734 + $0x60] sm:$0xff]
        %v748 = vld [vmem:[%s734 + $0x68] sm:$0xff]
        %v749 = vld [vmem:[%s734 + $0x70] sm:$0xff]
        %v750 = vld [vmem:[%s734 + $0x78] sm:$0xff]
        %v751 = vld [vmem:[%s734 + $0x80] sm:$0xff]
        %v752 = vld [vmem:[%s734 + $0x88] sm:$0xff]
        %v753 = vld [vmem:[%s734 + $0x90] sm:$0xff]
        %v754 = vld [vmem:[%s734 + $0x98] sm:$0xff]
        %v755 = vld [vmem:[%s734 + $0xa0] sm:$0xff]
        %v756 = vld [vmem:[%s734 + $0xa8] sm:$0xff]
        %v757 = vld [vmem:[%s734 + $0xb0] sm:$0xff]
        %v758 = vld [vmem:[%s734 + $0xb8] sm:$0xff]
        %v759 = vld [vmem:[%s734 + $0xc0] sm:$0xff]
        %v760 = vld [vmem:[%s734 + $0xc8] sm:$0xff]
        %v761 = vld [vmem:[%s734 + $0xd0] sm:$0xff]
        %v762 = vld [vmem:[%s734 + $0xd8] sm:$0xff]
        %vm767 = vcmask 1046528
        %v768 = vrot.slane %v730, 1
        %v769 = vrot.slane %v732, 1
        %v770 = vsel %vm767, %v768, %v769
        %v771 = vrot.slane %v731, 1
        %v772 = vrot.slane %v733, 1
        %v773 = vsel %vm767, %v771, %v772
        %v776 = vsel %vm335, %v773, 0
        %v778 = vsel %vm335, %v772, 0
        %780 = vmatprep.subr.mxu0 0.0
        %781 = vmatpush1.msra.mxu0 %v735
        %782 = vmatprep.subr.mxu0 0.0
        %783 = vmatpush1.msra.mxu0 %v736
        %784 = vmatprep.subr.mxu0 0.0
        %785 = vmatpush1.msra.mxu0 %v737
        %786 = vmatprep.subr.mxu0 0.0
        %787 = vmatpush1.msra.mxu0 %v738
        %788 = vmatprep.subr.mxu0 0.0
        %789 = vmatpush1.msra.mxu0 %v739
        %790 = vmatprep.subr.mxu0 0.0
        %791 = vmatpush1.msra.mxu0 %v740
        %792 = vmatprep.subr.mxu0 0.0
        %793 = vmatpush1.msra.mxu0 %v741
        %794 = vmatprep.subr.mxu0 0.0
        %795 = vmatpush1.msra.mxu0 %v742
        %796 = vmatprep.subr.mxu0 0.0
        %797 = vmatpush1.msra.mxu0 %v743
        %798 = vmatprep.subr.mxu0 0.0
        %799 = vmatpush1.msra.mxu0 %v744
        %800 = vmatprep.subr.mxu0 0.0
        %801 = vmatpush1.msra.mxu0 %v745
        %802 = vmatprep.subr.mxu0 0.0
        %803 = vmatpush1.msra.mxu0 %v746
        %804 = vmatprep.subr.mxu0 0.0
        %805 = vmatpush1.msra.mxu0 %v747
        %806 = vmatprep.subr.mxu0 0.0
        %807 = vmatpush1.msra.mxu0 %v748
        %808 = vmatprep.subr.mxu0 0.0
        %809 = vmatpush1.msra.mxu0 %v749
        %810 = vmatprep.subr.mxu0 0.0
        %811 = vmatpush1.msra.mxu0 %v750
        %812 = vmatprep.subr.mxu0 0.0
        %813 = vmatpush1.msra.mxu0 %v751
        %814 = vmatprep.subr.mxu0 0.0
        %815 = vmatpush1.msra.mxu0 %v752
        %816 = vmatprep.subr.mxu0 0.0
        %817 = vmatpush1.msra.mxu0 %v753
        %818 = vmatprep.subr.mxu0 0.0
        %819 = vmatpush1.msra.mxu0 %v754
        %820 = vmatprep.subr.mxu0 0.0
        %821 = vmatpush1.msra.mxu0 %v755
        %822 = vmatprep.subr.mxu0 0.0
        %823 = vmatpush1.msra.mxu0 %v756
        %824 = vmatprep.subr.mxu0 0.0
        %825 = vmatpush1.msra.mxu0 %v757
        %826 = vmatprep.subr.mxu0 0.0
        %827 = vmatpush1.msra.mxu0 %v758
        %828 = vmatprep.subr.mxu0 0.0
        %829 = vmatpush1.msra.mxu0 %v759
        %830 = vmatprep.subr.mxu0 0.0
        %831 = vmatpush1.msra.mxu0 %v760
        %832 = vmatprep.subr.mxu0 0.0
        %833 = vmatpush1.msra.mxu0 %v761
        %834 = vmatprep.subr.mxu0 0.0
        %835 = vmatpush1.msra.mxu0 %v762
        %836 = vmatprep.subr.mxu0 0.0
        %837 = vmatpush1.msra.mxu0 0.0
        %838 = vmatprep.subr.mxu0 0.0
        %839 = vmatpush1.msra.mxu0 0.0
        %840 = vmatprep.subr.mxu0 0.0
        %841 = vmatpush1.msra.mxu0 0.0
        %842 = vmatprep.subr.mxu0 0.0
        %843 = vmatpush1.msra.mxu0 0.0
        %844 = vmatprep.mubr.f32.mxu0 %v776
        %845 = vmatmul.mubr.f32.gmra.mrb[0].mxu0 %v770
        %v846 = vpop.f32.mrb[0].mxu0
        %v847 = vadd.f32 0.0, %v846
        %v848 = vpop.f32.mrb[0].mxu0
        %849 = vmatprep.mubr.f32.mxu0 %v778
        %850 = vmatmul.mubr.f32.gmra.mrb[0].mxu0 %v769
        %v851 = vpop.f32.mrb[0].mxu0
        %v852 = vadd.f32 0.0, %v851
        %v853 = vpop.f32.mrb[0].mxu0
        %854 = vdwg.mxu0
        %v856 = vsel %vm335, %v699, 0
        %v859 = vsel %vm335, %v701, 0
        %861 = vmatprep.subr.mxu0 0.0
        %862 = vmatpush1.msra.mxu0 %v702
        %863 = vmatprep.subr.mxu0 0.0
        %864 = vmatpush1.msra.mxu0 %v703
        %865 = vmatprep.subr.mxu0 0.0
        %866 = vmatpush1.msra.mxu0 %v704
        %867 = vmatprep.subr.mxu0 0.0
        %868 = vmatpush1.msra.mxu0 %v705
        %869 = vmatprep.subr.mxu0 0.0
        %870 = vmatpush1.msra.mxu0 %v706
        %871 = vmatprep.subr.mxu0 0.0
        %872 = vmatpush1.msra.mxu0 %v707
        %873 = vmatprep.subr.mxu0 0.0
        %874 = vmatpush1.msra.mxu0 %v708
        %875 = vmatprep.subr.mxu0 0.0
        %876 = vmatpush1.msra.mxu0 %v709
        %877 = vmatprep.subr.mxu0 0.0
        %878 = vmatpush1.msra.mxu0 %v710
        %879 = vmatprep.subr.mxu0 0.0
        %880 = vmatpush1.msra.mxu0 %v711
        %881 = vmatprep.subr.mxu0 0.0
        %882 = vmatpush1.msra.mxu0 %v712
        %883 = vmatprep.subr.mxu0 0.0
        %884 = vmatpush1.msra.mxu0 %v713
        %885 = vmatprep.subr.mxu0 0.0
        %886 = vmatpush1.msra.mxu0 %v714
        %887 = vmatprep.subr.mxu0 0.0
        %888 = vmatpush1.msra.mxu0 %v715
        %889 = vmatprep.subr.mxu0 0.0
        %890 = vmatpush1.msra.mxu0 %v716
        %891 = vmatprep.subr.mxu0 0.0
        %892 = vmatpush1.msra.mxu0 %v717
        %893 = vmatprep.subr.mxu0 0.0
        %894 = vmatpush1.msra.mxu0 %v718
        %895 = vmatprep.subr.mxu0 0.0
        %896 = vmatpush1.msra.mxu0 %v719
        %897 = vmatprep.subr.mxu0 0.0
        %898 = vmatpush1.msra.mxu0 %v720
        %899 = vmatprep.subr.mxu0 0.0
        %900 = vmatpush1.msra.mxu0 %v721
        %901 = vmatprep.subr.mxu0 0.0
        %902 = vmatpush1.msra.mxu0 %v722
        %903 = vmatprep.subr.mxu0 0.0
        %904 = vmatpush1.msra.mxu0 %v723
        %905 = vmatprep.subr.mxu0 0.0
        %906 = vmatpush1.msra.mxu0 %v724
        %907 = vmatprep.subr.mxu0 0.0
        %908 = vmatpush1.msra.mxu0 %v725
        %909 = vmatprep.subr.mxu0 0.0
        %910 = vmatpush1.msra.mxu0 %v726
        %911 = vmatprep.subr.mxu0 0.0
        %912 = vmatpush1.msra.mxu0 %v727
        %913 = vmatprep.subr.mxu0 0.0
        %914 = vmatpush1.msra.mxu0 %v728
        %915 = vmatprep.subr.mxu0 0.0
        %916 = vmatpush1.msra.mxu0 %v729
        %917 = vmatprep.subr.mxu0 0.0
        %918 = vmatpush1.msra.mxu0 0.0
        %919 = vmatprep.subr.mxu0 0.0
        %920 = vmatpush1.msra.mxu0 0.0
        %921 = vmatprep.subr.mxu0 0.0
        %922 = vmatpush1.msra.mxu0 0.0
        %923 = vmatprep.subr.mxu0 0.0
        %924 = vmatpush1.msra.mxu0 0.0
        %925 = vmatprep.mubr.f32.mxu0 %v856
        %926 = vmatmul.mubr.f32.gmra.mrb[0].mxu0 %v698
        %v927 = vpop.f32.mrb[0].mxu0
        %v928 = vadd.f32 %v847, %v927
        %v929 = vpop.f32.mrb[0].mxu0
        %930 = vmatprep.mubr.f32.mxu0 %v859
        %931 = vmatmul.mubr.f32.gmra.mrb[0].mxu0 %v700
        %v932 = vpop.f32.mrb[0].mxu0
        %v933 = vadd.f32 %v852, %v932
        %v934 = vpop.f32.mrb[0].mxu0
        %935 = vdwg.mxu0
        %v936 = vld [vmem:[#allocation3] sm:$0xfc]
        %v937 = vld [vmem:[#allocation3 + $0x8] sm:$0xfc]
        %v938 = vld [vmem:[#allocation3 + $0x10] sm:$0x3f]
        %v939 = vld [vmem:[#allocation3 + $0x18] sm:$0x3f]
        %s940 = scalar_lea.vmem [#allocation4], 448
        %v941 = vld [vmem:[%s940] sm:$0xff]
        %v942 = vld [vmem:[%s940 + $0x8] sm:$0xff]
        %v943 = vld [vmem:[%s940 + $0x10] sm:$0xff]
        %v944 = vld [vmem:[%s940 + $0x18] sm:$0xff]
        %v945 = vld [vmem:[%s940 + $0x20] sm:$0xff]
        %v946 = vld [vmem:[%s940 + $0x28] sm:$0xff]
        %v947 = vld [vmem:[%s940 + $0x30] sm:$0xff]
        %v948 = vld [vmem:[%s940 + $0x38] sm:$0xff]
        %v949 = vld [vmem:[%s940 + $0x40] sm:$0xff]
        %v950 = vld [vmem:[%s940 + $0x48] sm:$0xff]
        %v951 = vld [vmem:[%s940 + $0x50] sm:$0xff]
        %v952 = vld [vmem:[%s940 + $0x58] sm:$0xff]
        %v953 = vld [vmem:[%s940 + $0x60] sm:$0xff]
        %v954 = vld [vmem:[%s940 + $0x68] sm:$0xff]
        %v955 = vld [vmem:[%s940 + $0x70] sm:$0xff]
        %v956 = vld [vmem:[%s940 + $0x78] sm:$0xff]
        %v957 = vld [vmem:[%s940 + $0x80] sm:$0xff]
        %v958 = vld [vmem:[%s940 + $0x88] sm:$0xff]
        %v959 = vld [vmem:[%s940 + $0x90] sm:$0xff]
        %v960 = vld [vmem:[%s940 + $0x98] sm:$0xff]
        %v961 = vld [vmem:[%s940 + $0xa0] sm:$0xff]
        %v962 = vld [vmem:[%s940 + $0xa8] sm:$0xff]
        %v963 = vld [vmem:[%s940 + $0xb0] sm:$0xff]
        %v964 = vld [vmem:[%s940 + $0xb8] sm:$0xff]
        %v965 = vld [vmem:[%s940 + $0xc0] sm:$0xff]
        %v966 = vld [vmem:[%s940 + $0xc8] sm:$0xff]
        %v967 = vld [vmem:[%s940 + $0xd0] sm:$0xff]
        %v968 = vld [vmem:[%s940 + $0xd8] sm:$0xff]
        %vm973 = vcmask 1045504
        %v974 = vrot.slane %v936, 2
        %v975 = vrot.slane %v938, 2
        %v976 = vsel %vm973, %v974, %v975
        %v977 = vrot.slane %v937, 2
        %v978 = vrot.slane %v939, 2
        %v979 = vsel %vm973, %v977, %v978
        %v982 = vsel %vm335, %v979, 0
        %v984 = vsel %vm335, %v978, 0
        %986 = vmatprep.subr.mxu0 0.0
        %987 = vmatpush1.msra.mxu0 %v941
        %988 = vmatprep.subr.mxu0 0.0
        %989 = vmatpush1.msra.mxu0 %v942
        %990 = vmatprep.subr.mxu0 0.0
        %991 = vmatpush1.msra.mxu0 %v943
        %992 = vmatprep.subr.mxu0 0.0
        %993 = vmatpush1.msra.mxu0 %v944
        %994 = vmatprep.subr.mxu0 0.0
        %995 = vmatpush1.msra.mxu0 %v945
        %996 = vmatprep.subr.mxu0 0.0
        %997 = vmatpush1.msra.mxu0 %v946
        %998 = vmatprep.subr.mxu0 0.0
        %999 = vmatpush1.msra.mxu0 %v947
        %1000 = vmatprep.subr.mxu0 0.0
        %1001 = vmatpush1.msra.mxu0 %v948
        %1002 = vmatprep.subr.mxu0 0.0
        %1003 = vmatpush1.msra.mxu0 %v949
        %1004 = vmatprep.subr.mxu0 0.0
        %1005 = vmatpush1.msra.mxu0 %v950
        %1006 = vmatprep.subr.mxu0 0.0
        %1007 = vmatpush1.msra.mxu0 %v951
        %1008 = vmatprep.subr.mxu0 0.0
        %1009 = vmatpush1.msra.mxu0 %v952
        %1010 = vmatprep.subr.mxu0 0.0
        %1011 = vmatpush1.msra.mxu0 %v953
        %1012 = vmatprep.subr.mxu0 0.0
        %1013 = vmatpush1.msra.mxu0 %v954
        %1014 = vmatprep.subr.mxu0 0.0
        %1015 = vmatpush1.msra.mxu0 %v955
        %1016 = vmatprep.subr.mxu0 0.0
        %1017 = vmatpush1.msra.mxu0 %v956
        %1018 = vmatprep.subr.mxu0 0.0
        %1019 = vmatpush1.msra.mxu0 %v957
        %1020 = vmatprep.subr.mxu0 0.0
        %1021 = vmatpush1.msra.mxu0 %v958
        %1022 = vmatprep.subr.mxu0 0.0
        %1023 = vmatpush1.msra.mxu0 %v959
        %1024 = vmatprep.subr.mxu0 0.0
        %1025 = vmatpush1.msra.mxu0 %v960
        %1026 = vmatprep.subr.mxu0 0.0
        %1027 = vmatpush1.msra.mxu0 %v961
        %1028 = vmatprep.subr.mxu0 0.0
        %1029 = vmatpush1.msra.mxu0 %v962
        %1030 = vmatprep.subr.mxu0 0.0
        %1031 = vmatpush1.msra.mxu0 %v963
        %1032 = vmatprep.subr.mxu0 0.0
        %1033 = vmatpush1.msra.mxu0 %v964
        %1034 = vmatprep.subr.mxu0 0.0
        %1035 = vmatpush1.msra.mxu0 %v965
        %1036 = vmatprep.subr.mxu0 0.0
        %1037 = vmatpush1.msra.mxu0 %v966
        %1038 = vmatprep.subr.mxu0 0.0
        %1039 = vmatpush1.msra.mxu0 %v967
        %1040 = vmatprep.subr.mxu0 0.0
        %1041 = vmatpush1.msra.mxu0 %v968
        %1042 = vmatprep.subr.mxu0 0.0
        %1043 = vmatpush1.msra.mxu0 0.0
        %1044 = vmatprep.subr.mxu0 0.0
        %1045 = vmatpush1.msra.mxu0 0.0
        %1046 = vmatprep.subr.mxu0 0.0
        %1047 = vmatpush1.msra.mxu0 0.0
        %1048 = vmatprep.subr.mxu0 0.0
        %1049 = vmatpush1.msra.mxu0 0.0
        %1050 = vmatprep.mubr.f32.mxu0 %v982
        %1051 = vmatmul.mubr.f32.gmra.mrb[0].mxu0 %v976
        %v1052 = vpop.f32.mrb[0].mxu0
        %v1053 = vadd.f32 0.0, %v1052
        %v1054 = vpop.f32.mrb[0].mxu0
        %1055 = vmatprep.mubr.f32.mxu0 %v984
        %1056 = vmatmul.mubr.f32.gmra.mrb[0].mxu0 %v975
        %v1057 = vpop.f32.mrb[0].mxu0
        %v1058 = vadd.f32 0.0, %v1057
        %v1059 = vpop.f32.mrb[0].mxu0
        %1060 = vdwg.mxu0
        %v1061 = vadd.f32 %v928, %v1053
        %v1062 = vadd.f32 %v933, %v1058
        %v1063 = vld [vmem:[%s4] sm:$0x1]
        %v1065 = vlaneseq
        %v1066 = vshrl.u32 %v1065, 7
        %v1067 = vsub.s32 0, %v1066
        %v1068 = vrot.slane %v1063, %v1067
        %v1070 = vadd.f32 %v1061, %v1068
        %v1071 = vadd.f32 %v1062, %v1068
        %v1072 = vmax.f32 %v1070, 0.0
        %v1073 = vmax.f32 %v1071, 0.0
        %v1074 = vld [vmem:[#allocation7] sm:$0xff]
        %v1075 = vld [vmem:[#allocation7 + $0x8] sm:$0xff]
        %v1076 = vld [vmem:[#allocation7 + $0x10] sm:$0xff]
        %v1077 = vld [vmem:[#allocation7 + $0x18] sm:$0xff]
        %v1078 = vld [vmem:[#allocation7 + $0x20] sm:$0xff]
        %v1079 = vld [vmem:[#allocation7 + $0x28] sm:$0xff]
        %v1080 = vld [vmem:[#allocation7 + $0x30] sm:$0xff]
        %v1081 = vld [vmem:[#allocation7 + $0x38] sm:$0xff]
        %v1082 = vld [vmem:[#allocation7 + $0x40] sm:$0xff]
        %v1083 = vld [vmem:[#allocation7 + $0x48] sm:$0xff]
        %v1084 = vld [vmem:[#allocation7 + $0x50] sm:$0xff]
        %v1085 = vld [vmem:[#allocation7 + $0x58] sm:$0xff]
        %v1086 = vld [vmem:[#allocation7 + $0x60] sm:$0xff]
        %v1087 = vld [vmem:[#allocation7 + $0x68] sm:$0xff]
        %v1088 = vld [vmem:[#allocation7 + $0x70] sm:$0xff]
        %v1089 = vld [vmem:[%s6] sm:$0x1]
        %v1091 = vlaneseq
        %v1092 = vshrl.u32 %v1091, 7
        %v1093 = vsub.s32 0, %v1092
        %v1094 = vrot.slane %v1089, %v1093
        %vm1096 = vcmask 982016
        %v1098 = vsel %vm1096, %v1072, 0
        %v1101 = vsel %vm1096, %v1073, 0
        %1103 = vmatprep.subr.mxu0 0.0
        %1104 = vmatpush1.msra.mxu0 %v1074
        %1105 = vmatprep.subr.mxu0 0.0
        %1106 = vmatpush1.msra.mxu0 %v1075
        %1107 = vmatprep.subr.mxu0 0.0
        %1108 = vmatpush1.msra.mxu0 %v1076
        %1109 = vmatprep.subr.mxu0 0.0
        %1110 = vmatpush1.msra.mxu0 %v1077
        %1111 = vmatprep.subr.mxu0 0.0
        %1112 = vmatpush1.msra.mxu0 %v1078
        %1113 = vmatprep.subr.mxu0 0.0
        %1114 = vmatpush1.msra.mxu0 %v1079
        %1115 = vmatprep.subr.mxu0 0.0
        %1116 = vmatpush1.msra.mxu0 %v1080
        %1117 = vmatprep.subr.mxu0 0.0
        %1118 = vmatpush1.msra.mxu0 %v1081
        %1119 = vmatprep.subr.mxu0 0.0
        %1120 = vmatpush1.msra.mxu0 %v1082
        %1121 = vmatprep.subr.mxu0 0.0
        %1122 = vmatpush1.msra.mxu0 %v1083
        %1123 = vmatprep.subr.mxu0 0.0
        %1124 = vmatpush1.msra.mxu0 %v1084
        %1125 = vmatprep.subr.mxu0 0.0
        %1126 = vmatpush1.msra.mxu0 %v1085
        %1127 = vmatprep.subr.mxu0 0.0
        %1128 = vmatpush1.msra.mxu0 %v1086
        %1129 = vmatprep.subr.mxu0 0.0
        %1130 = vmatpush1.msra.mxu0 %v1087
        %1131 = vmatprep.subr.mxu0 0.0
        %1132 = vmatpush1.msra.mxu0 %v1088
        %1133 = vmatprep.subr.mxu0 0.0
        %1134 = vmatpush1.msra.mxu0 0.0
        %1135 = vmatprep.subr.mxu0 0.0
        %1136 = vmatpush1.msra.mxu0 0.0
        %1137 = vmatprep.subr.mxu0 0.0
        %1138 = vmatpush1.msra.mxu0 0.0
        %1139 = vmatprep.subr.mxu0 0.0
        %1140 = vmatpush1.msra.mxu0 0.0
        %1141 = vmatprep.subr.mxu0 0.0
        %1142 = vmatpush1.msra.mxu0 0.0
        %1143 = vmatprep.subr.mxu0 0.0
        %1144 = vmatpush1.msra.mxu0 0.0
        %1145 = vmatprep.subr.mxu0 0.0
        %1146 = vmatpush1.msra.mxu0 0.0
        %1147 = vmatprep.subr.mxu0 0.0
        %1148 = vmatpush1.msra.mxu0 0.0
        %1149 = vmatprep.subr.mxu0 0.0
        %1150 = vmatpush1.msra.mxu0 0.0
        %1151 = vmatprep.subr.mxu0 0.0
        %1152 = vmatpush1.msra.mxu0 0.0
        %1153 = vmatprep.subr.mxu0 0.0
        %1154 = vmatpush1.msra.mxu0 0.0
        %1155 = vmatprep.subr.mxu0 0.0
        %1156 = vmatpush1.msra.mxu0 0.0
        %1157 = vmatprep.subr.mxu0 0.0
        %1158 = vmatpush1.msra.mxu0 0.0
        %1159 = vmatprep.subr.mxu0 0.0
        %1160 = vmatpush1.msra.mxu0 0.0
        %1161 = vmatprep.subr.mxu0 0.0
        %1162 = vmatpush1.msra.mxu0 0.0
        %1163 = vmatprep.subr.mxu0 0.0
        %1164 = vmatpush1.msra.mxu0 0.0
        %1165 = vmatprep.subr.mxu0 0.0
        %1166 = vmatpush1.msra.mxu0 0.0
        %1167 = vmatprep.mubr.f32.mxu0 0.0
        %1168 = vmatmul.mubr.f32.gmra.mrb[0].mxu0 %v1098
        %v1169 = vpop.f32.mrb[0].mxu0
        %v1170 = vadd.f32 %v1094, %v1169
        %v1171 = vpop.f32.mrb[0].mxu0
        %1172 = vmatprep.mubr.f32.mxu0 0.0
        %1173 = vmatmul.mubr.f32.gmra.mrb[0].mxu0 %v1101
        %v1174 = vpop.f32.mrb[0].mxu0
        %v1175 = vadd.f32 %v1094, %v1174
        %v1176 = vpop.f32.mrb[0].mxu0
        %1177 = vdwg.mxu0
        %v1178 = vmax.f32 %v1170, 0.0
        %v1179 = vmax.f32 %v1175, 0.0
        %v1180 = vld [vmem:[%s7] sm:$0xff]
        %v1181 = vld [vmem:[%s7 + $0x8] sm:$0xff]
        %v1182 = vld [vmem:[%s7 + $0x10] sm:$0xff]
        %v1183 = vld [vmem:[%s7 + $0x18] sm:$0xff]
        %v1184 = vld [vmem:[%s7 + $0x20] sm:$0xff]
        %v1185 = vld [vmem:[%s7 + $0x28] sm:$0xff]
        %v1186 = vld [vmem:[%s7 + $0x30] sm:$0xff]
        %v1187 = vld [vmem:[%s7 + $0x38] sm:$0xff]
        %v1188 = vld [vmem:[%s7 + $0x40] sm:$0xff]
        %v1189 = vld [vmem:[%s7 + $0x48] sm:$0xff]
        %v1190 = vld [vmem:[%s7 + $0x50] sm:$0xff]
        %v1191 = vld [vmem:[%s7 + $0x58] sm:$0xff]
        %v1192 = vld [vmem:[%s7 + $0x60] sm:$0xff]
        %v1193 = vld [vmem:[%s7 + $0x68] sm:$0xff]
        %v1194 = vld [vmem:[%s7 + $0x70] sm:$0xff]
        %v1196 = vsel %vm1096, %v1178, 0
        %v1199 = vsel %vm1096, %v1179, 0
        %1201 = vmatprep.subr.mxu0 0.0
        %1202 = vmatpush1.msra.mxu0 %v1180
        %1203 = vmatprep.subr.mxu0 0.0
        %1204 = vmatpush1.msra.mxu0 %v1181
        %1205 = vmatprep.subr.mxu0 0.0
        %1206 = vmatpush1.msra.mxu0 %v1182
        %1207 = vmatprep.subr.mxu0 0.0
        %1208 = vmatpush1.msra.mxu0 %v1183
        %1209 = vmatprep.subr.mxu0 0.0
        %1210 = vmatpush1.msra.mxu0 %v1184
        %1211 = vmatprep.subr.mxu0 0.0
        %1212 = vmatpush1.msra.mxu0 %v1185
        %1213 = vmatprep.subr.mxu0 0.0
        %1214 = vmatpush1.msra.mxu0 %v1186
        %1215 = vmatprep.subr.mxu0 0.0
        %1216 = vmatpush1.msra.mxu0 %v1187
        %1217 = vmatprep.subr.mxu0 0.0
        %1218 = vmatpush1.msra.mxu0 %v1188
        %1219 = vmatprep.subr.mxu0 0.0
        %1220 = vmatpush1.msra.mxu0 %v1189
        %1221 = vmatprep.subr.mxu0 0.0
        %1222 = vmatpush1.msra.mxu0 %v1190
        %1223 = vmatprep.subr.mxu0 0.0
        %1224 = vmatpush1.msra.mxu0 %v1191
        %1225 = vmatprep.subr.mxu0 0.0
        %1226 = vmatpush1.msra.mxu0 %v1192
        %1227 = vmatprep.subr.mxu0 0.0
        %1228 = vmatpush1.msra.mxu0 %v1193
        %1229 = vmatprep.subr.mxu0 0.0
        %1230 = vmatpush1.msra.mxu0 %v1194
        %1231 = vmatprep.subr.mxu0 0.0
        %1232 = vmatpush1.msra.mxu0 0.0
        %1233 = vmatprep.subr.mxu0 0.0
        %1234 = vmatpush1.msra.mxu0 0.0
        %1235 = vmatprep.subr.mxu0 0.0
        %1236 = vmatpush1.msra.mxu0 0.0
        %1237 = vmatprep.subr.mxu0 0.0
        %1238 = vmatpush1.msra.mxu0 0.0
        %1239 = vmatprep.subr.mxu0 0.0
        %1240 = vmatpush1.msra.mxu0 0.0
        %1241 = vmatprep.subr.mxu0 0.0
        %1242 = vmatpush1.msra.mxu0 0.0
        %1243 = vmatprep.subr.mxu0 0.0
        %1244 = vmatpush1.msra.mxu0 0.0
        %1245 = vmatprep.subr.mxu0 0.0
        %1246 = vmatpush1.msra.mxu0 0.0
        %1247 = vmatprep.subr.mxu0 0.0
        %1248 = vmatpush1.msra.mxu0 0.0
        %1249 = vmatprep.subr.mxu0 0.0
        %1250 = vmatpush1.msra.mxu0 0.0
        %1251 = vmatprep.subr.mxu0 0.0
        %1252 = vmatpush1.msra.mxu0 0.0
        %1253 = vmatprep.subr.mxu0 0.0
        %1254 = vmatpush1.msra.mxu0 0.0
        %1255 = vmatprep.subr.mxu0 0.0
        %1256 = vmatpush1.msra.mxu0 0.0
        %1257 = vmatprep.subr.mxu0 0.0
        %1258 = vmatpush1.msra.mxu0 0.0
        %1259 = vmatprep.subr.mxu0 0.0
        %1260 = vmatpush1.msra.mxu0 0.0
        %1261 = vmatprep.subr.mxu0 0.0
        %1262 = vmatpush1.msra.mxu0 0.0
        %1263 = vmatprep.subr.mxu0 0.0
        %1264 = vmatpush1.msra.mxu0 0.0
        %1265 = vmatprep.mubr.f32.mxu0 0.0
        %1266 = vmatmul.mubr.f32.gmra.mrb[0].mxu0 %v1196
        %v1267 = vpop.f32.mrb[0].mxu0
        %v1268 = vadd.f32 0.0, %v1267
        %v1269 = vpop.f32.mrb[0].mxu0
        %1270 = vmatprep.mubr.f32.mxu0 0.0
        %1271 = vmatmul.mubr.f32.gmra.mrb[0].mxu0 %v1199
        %v1272 = vpop.f32.mrb[0].mxu0
        %v1273 = vadd.f32 0.0, %v1272
        %v1274 = vpop.f32.mrb[0].mxu0
        %1275 = vdwg.mxu0
        %vm1276 = vcmask 80896
        %v1277 = vsel %vm1276, %v1268, 0.0
        %vm1278 = vcmask 76800
        %v1279 = vsel %vm1278, %v1273, 0.0
        %v1280 = vadd.f32 %v1277, %v1279
        %v1281 = vrot.slane %v1280, 4
        %v1282 = vadd.f32 %v1280, %v1281
        %v1283 = vrot.slane %v1282, 2
        %v1284 = vadd.f32 %v1282, %v1283
        %v1285 = vrot.slane %v1284, 1
        %v1286 = vadd.f32 %v1284, %v1285
        %vm1287 = vcmask 73728
        %1288 = vst.msk [vmem:[%s325] sm:$0x1] %vm1287, %v1286
        %s1289 = sand.u32 %s205, 1
        %s1290 = scalar_lea.sflag [#allocation6], %s1289
        %s1291 = sand.u32 %s205, 1
        %s1292 = scalar_lea.vmem [#allocation9], %s1291
        // Predicated region
        $region61: #{haptic_head_forward.1} parent=51 // pred_check
          %p1293 = pneg %p215
        $region62: #{haptic_head_forward.1} parent=51 // pred_check_branch
          %1295 = sbr.rel (%p1293) target = $region64
        $region63: #{haptic_head_forward.1} parent=51 // pred_region
          %s1297 = ssub.s32 16, 16
          %1298 = vsyncadd %s1290, %s1297
          %s1299 = smul.addr %s24, 16
          %s1300 = scalar_lea.hbm %s8, %s1299
          %s1302 = sshll.u32 %s1292, 4
          %s1303 = int_to_ptr.vmem [resolvable:$true] %s1302
          %1305 = dma.vmem_to_hbm [thread:$0]  %s1303, 16, %s1300, %s1290
        $region64: #{haptic_head_forward.1} parent=51 // pred_fallthru
          _
      $region52: #{haptic_head_forward.1} parent=5 // pred_fallthru
        _
      %p1306 = scmp.le.s32.totalorder 2, %s19
      // Predicated region
      $region65: #{haptic_head_forward.1} parent=5 // pred_check
        %p1307 = pneg %p1306
      $region66: #{haptic_head_forward.1} parent=5 // pred_check_branch
        %1309 = sbr.rel (%p1307) target = $region68
      $region67: #{haptic_head_forward.1} parent=5 // pred_region
        %s1310 = ssub.s32 %s19, 2
        // Predicated region
        $region69: #{haptic_head_forward.1} parent=67 // pred_check
          %p1311 = pneg %p221
        $region70: #{haptic_head_forward.1} parent=67 // pred_check_branch
          %1313 = sbr.rel (%p1311) target = $region72
        $region71: #{haptic_head_forward.1} parent=67 // pred_region
          %s1314 = sand.u32 %s206, 1
          %s1315 = scalar_lea.sflag [#allocation6], %s1314
          %s1316 = sand.u32 %s206, 1
          %s1317 = scalar_lea.vmem [#allocation9], %s1316
          %1318 = dma.done %s1315, 16
        $region72: #{haptic_head_forward.1} parent=67 // pred_fallthru
          _
      $region68: #{haptic_head_forward.1} parent=5 // pred_fallthru
        _
    $region6: #{haptic_head_forward.1} parent=1 // loop_footer
      %s23 = sadd.s32 1, %s19
    $region7: #{haptic_head_forward.1} parent=1 // loop_footer_branch
      %18 = sbr.rel target = $region3
    $region8: #{haptic_head_forward.1} parent=1 // loop_exit
      _
    %1319 = vsyncpa [#allocation5], 1
    %s1320 = scalar_lea.sflag [#allocation5], 1
    %1321 = vsyncpa %s1320, 1
    %1322 = vsyncpa [#allocation8], 1
    %1323 = vsyncpa [#allocation6], 1
    %s1324 = scalar_lea.sflag [#allocation6], 1
    %1325 = vsyncpa %s1324, 1

</llo_original>
